<compile_context>
chip_gen: v5e
topology: v5e:2x2
jax: 0.10.0
libtpu: 0.0.40
codegen_flags: <defaults>
</compile_context>

<pallas_src>
import functools

import jax
import jax.numpy as jnp
from jax.experimental import pallas as pl
from jax.experimental.pallas import tpu as pltpu

LN_EPS = 1e-5  # nn.LayerNorm default


def _layer_norm(x, w, b):
    mu = jnp.mean(x, axis=-1, keepdims=True)
    var = jnp.mean((x - mu) ** 2, axis=-1, keepdims=True)
    return (x - mu) * jax.lax.rsqrt(var + LN_EPS) * w + b


# ----------------------------- Pallas kernel ------------------------------ #
def transformer_kernel(x_ref,
                       ln1w_ref, ln1b_ref, wqkv_ref, wo_ref, bo_ref,
                       ln2w_ref, ln2b_ref, w12_ref, b12_ref, w3_ref, b3_ref,
                       o_ref,
                       *, batch, seq, num_head, dim_head, hidden):
    layer = pl.program_id(0)

    # Layer 0: seed the VMEM-resident activation block from the input.
    @pl.when(layer == 0)
    def _():
        o_ref[...] = x_ref[...]

    x = o_ref[...]                                   # (B*N, D) f32
    hd = num_head * dim_head

    # ---- LayerNorm 1 (biased variance, eps=1e-5, affine) ----
    xn = _layer_norm(x, ln1w_ref[...], ln1b_ref[...])

    # ---- attention: fused full-width QKV projection (scale folded into Wq) ----
    qkv = jnp.dot(xn, wqkv_ref[...], preferred_element_type=jnp.float32)  # (B*N, 3*HD)

    rows = []
    for b in range(batch):                           # static, tiny
        r0 = b * seq
        heads = []
        for h in range(num_head):                    # static, tiny
            c0 = h * dim_head
            qh = qkv[r0:r0 + seq, c0:c0 + dim_head]                        # (N, Dh)
            kh = qkv[r0:r0 + seq, hd + c0:hd + c0 + dim_head]              # (N, Dh)
            vh = qkv[r0:r0 + seq, 2 * hd + c0:2 * hd + c0 + dim_head]      # (N, Dh)
            s = jax.lax.dot_general(qh, kh, (((1,), (1,)), ((), ())),
                                    preferred_element_type=jnp.float32)    # (N, N)
            s = s - jnp.max(s, axis=-1, keepdims=True)
            p = jnp.exp(s)
            p = p * pl.reciprocal(jnp.sum(p, axis=-1, keepdims=True), approx=False)
            heads.append(jnp.dot(p, vh, preferred_element_type=jnp.float32))  # (N, Dh)
        rows.append(jnp.concatenate(heads, axis=-1))  # (N, HD)
    attn = jnp.concatenate(rows, axis=0)              # (B*N, HD)

    # single output projection + residual
    x = x + jnp.dot(attn, wo_ref[...], preferred_element_type=jnp.float32) + bo_ref[...]

    # ---- LayerNorm 2 + SwiGLUFFNFused ----
    xn2 = _layer_norm(x, ln2w_ref[...], ln2b_ref[...])
    h12 = jnp.dot(xn2, w12_ref[...], preferred_element_type=jnp.float32) + b12_ref[...]
    h1 = h12[:, :hidden]
    h2 = h12[:, hidden:]
    hid = h1 * jax.nn.sigmoid(h1) * h2
    ff = jnp.dot(hid, w3_ref[...], preferred_element_type=jnp.float32) + b3_ref[...]

    o_ref[...] = x + ff


# ------------------------------ wrapper ----------------------------------- #
PARAM_ORDER = ['ln1w', 'ln1b', 'wqkv', 'wo', 'bo',
               'ln2w', 'ln2b', 'w12', 'b12', 'w3', 'b3']


def transformer_forward(x, layer_params, *, num_head, dim_head):
    B, N, D = x.shape
    depth = len(layer_params)
    HD = num_head * dim_head
    hidden = layer_params[0]['w1'].shape[1]
    scale = float(dim_head) ** -0.5

    def fuse_qkv(p):
        # per-head (H, D, Dh) -> (D, H*Dh); softmax scale folded into Wq.
        wq = jnp.transpose(p['wq'], (1, 0, 2)).reshape(D, HD) * scale
        wk = jnp.transpose(p['wk'], (1, 0, 2)).reshape(D, HD)
        wv = jnp.transpose(p['wv'], (1, 0, 2)).reshape(D, HD)
        return jnp.concatenate([wq, wk, wv], axis=-1)          # (D, 3*HD)

    stacked = {
        'ln1w': jnp.stack([p['ln1w'] for p in layer_params]),
        'ln1b': jnp.stack([p['ln1b'] for p in layer_params]),
        'wqkv': jnp.stack([fuse_qkv(p) for p in layer_params]),
        'wo':   jnp.stack([p['wo'].reshape(HD, D) for p in layer_params]),
        'bo':   jnp.stack([p['bo'] for p in layer_params]),
        'ln2w': jnp.stack([p['ln2w'] for p in layer_params]),
        'ln2b': jnp.stack([p['ln2b'] for p in layer_params]),
        'w12':  jnp.stack([jnp.concatenate([p['w1'], p['w2']], -1) for p in layer_params]),
        'b12':  jnp.stack([jnp.concatenate([p['b1'], p['b2']], -1) for p in layer_params]),
        'w3':   jnp.stack([p['w3'] for p in layer_params]),
        'b3':   jnp.stack([p['b3'] for p in layer_params]),
    }

    def weight_spec(arr):
        rest = arr.shape[1:]
        # leading depth dim squeezed; pick layer l's slab each grid step.
        return pl.BlockSpec((None,) + rest,
                            lambda l, _n=len(rest): (l,) + (0,) * _n)

    xf = x.reshape(B * N, D)                                   # batch folded into M
    act_spec = pl.BlockSpec((B * N, D), lambda l: (0, 0))      # resident across layers

    kernel = functools.partial(transformer_kernel,
                               batch=B, seq=N,
                               num_head=num_head, dim_head=dim_head,
                               hidden=hidden)

    out = pl.pallas_call(
        kernel,
        out_shape=jax.ShapeDtypeStruct((B * N, D), jnp.float32),
        grid_spec=pltpu.PrefetchScalarGridSpec(
            num_scalar_prefetch=0,
            grid=(depth,),
            in_specs=[act_spec] + [weight_spec(stacked[n]) for n in PARAM_ORDER],
            out_specs=act_spec,
        ),
        compiler_params=pltpu.CompilerParams(
            dimension_semantics=("arbitrary",)),   # layers are sequential
    )(xf, *[stacked[n] for n in PARAM_ORDER])

    return out.reshape(B, N, D)


# --------------------------- parameter init ------------------------------- #
def swiglu_hidden(mlp_dim):
    # SwiGLUFFNFused: hidden_features = (int(hidden_features * 2 / 3) + 7) // 8 * 8
    return (int(mlp_dim * 2 / 3) + 7) // 8 * 8


def init_layer_params(key, dim, num_head, dim_head, mlp_dim):
    hidden = swiglu_hidden(mlp_dim)
    ks = jax.random.split(key, 10)
    s = 0.2
    f32 = jnp.float32
    return {
        'ln1w': jnp.ones((1, dim), f32),
        'ln1b': jnp.zeros((1, dim), f32),
        'wq': s * jax.random.normal(ks[0], (num_head, dim, dim_head), f32),
        'wk': s * jax.random.normal(ks[1], (num_head, dim, dim_head), f32),
        'wv': s * jax.random.normal(ks[2], (num_head, dim, dim_head), f32),
        'wo': s * jax.random.normal(ks[3], (num_head, dim_head, dim), f32),
        'bo': s * jax.random.normal(ks[4], (1, dim), f32),
        'ln2w': jnp.ones((1, dim), f32),
        'ln2b': jnp.zeros((1, dim), f32),
        'w1': s * jax.random.normal(ks[5], (dim, hidden), f32),
        'b1': s * jax.random.normal(ks[6], (1, hidden), f32),
        'w2': s * jax.random.normal(ks[7], (dim, hidden), f32),
        'b2': s * jax.random.normal(ks[8], (1, hidden), f32),
        'w3': s * jax.random.normal(ks[9], (hidden, dim), f32),
        'b3': jnp.zeros((1, dim), f32),
    }


# --------------------------- pure-JAX reference ---------------------------- #
def ref_layer(x, p, num_head, dim_head):
    def ln(x, w, b):
        mu = x.mean(-1, keepdims=True)
        var = ((x - mu) ** 2).mean(-1, keepdims=True)
        return (x - mu) / jnp.sqrt(var + LN_EPS) * w + b

    xn = ln(x, p['ln1w'][0], p['ln1b'][0])
    q = jnp.einsum('bnd,hde->bhne', xn, p['wq'])
    k = jnp.einsum('bnd,hde->bhne', xn, p['wk'])
    v = jnp.einsum('bnd,hde->bhne', xn, p['wv'])
    sim = jnp.einsum('bhie,bhje->bhij', q, k) * (float(dim_head) ** -0.5)
    attn = jax.nn.softmax(sim, axis=-1)
    out = jnp.einsum('bhij,bhje->bhie', attn, v)
    proj = jnp.einsum('bhne,hed->bnd', out, p['wo']) + p['bo'][0]
    x = x + proj

    xn2 = ln(x, p['ln2w'][0], p['ln2b'][0])
    h1 = xn2 @ p['w1'] + p['b1'][0]
    h2 = xn2 @ p['w2'] + p['b2'][0]
    ff = (jax.nn.silu(h1) * h2) @ p['w3'] + p['b3'][0]
    return x + ff


def ref_transformer(x, layer_params, num_head, dim_head):
    for p in layer_params:
        x = ref_layer(x, p, num_head, dim_head)
    return x


# --------------------------------- main ------------------------------------ #
if __name__ == "__main__":
    # Transformer(layer_type='normal', dim=32, depth=2, num_head=4, dim_head=8,
    #             mlp_dim=64, dropout=0.0)
    B, N = 2, 8
    dim, depth, num_head, dim_head, mlp_dim = 32, 2, 4, 8, 64

    key = jax.random.PRNGKey(0)
    kx, kp = jax.random.split(key)
    x = jax.random.normal(kx, (B, N, dim), jnp.float32)

    layer_params = [
        init_layer_params(jax.random.fold_in(kp, i), dim, num_head, dim_head, mlp_dim)
        for i in range(depth)
    ]

    out = transformer_forward(x, layer_params, num_head=num_head, dim_head=dim_head)
    out = jax.block_until_ready(out)

    ref = ref_transformer(x, layer_params, num_head, dim_head)
    assert out.shape == (B, N, dim)
    assert jnp.allclose(out, ref, rtol=1e-4, atol=1e-4), \
        f"max abs err = {jnp.max(jnp.abs(out - ref))}"

    print("KERNEL_OK")
</pallas_src>

<mosaic_0001>
module attributes {stable_mosaic.version = 11 : i64} {
  func.func @transformer_kernel(%arg0: i32, %arg1: memref<16x32xf32, #tpu.memory_space<vmem>>, %arg2: memref<1x1x32xf32, #tpu.memory_space<vmem>>, %arg3: memref<1x1x32xf32, #tpu.memory_space<vmem>>, %arg4: memref<1x32x96xf32, #tpu.memory_space<vmem>>, %arg5: memref<1x32x32xf32, #tpu.memory_space<vmem>>, %arg6: memref<1x1x32xf32, #tpu.memory_space<vmem>>, %arg7: memref<1x1x32xf32, #tpu.memory_space<vmem>>, %arg8: memref<1x1x32xf32, #tpu.memory_space<vmem>>, %arg9: memref<1x32x96xf32, #tpu.memory_space<vmem>>, %arg10: memref<1x1x96xf32, #tpu.memory_space<vmem>>, %arg11: memref<1x48x32xf32, #tpu.memory_space<vmem>>, %arg12: memref<1x1x32xf32, #tpu.memory_space<vmem>>, %arg13: memref<16x32xf32, #tpu.memory_space<vmem>>) attributes {dimension_semantics = [#tpu.dimension_semantics<arbitrary>], iteration_bounds = array<i64: 2>, scalar_prefetch = 0 : i64, scratch_operands = 0 : i64, tpu.core_type = #tpu.core_type<tc>, window_params = [{pipeline_mode = #tpu.pipeline_mode<synchronous>, transform_indices = @transform_0, window_bounds = array<i64: 16, 32>}, {transform_indices = @transform_1, window_bounds = array<i64: 1, 1, 32>}, {transform_indices = @transform_2, window_bounds = array<i64: 1, 1, 32>}, {transform_indices = @transform_3, window_bounds = array<i64: 1, 32, 96>}, {transform_indices = @transform_4, window_bounds = array<i64: 1, 32, 32>}, {transform_indices = @transform_5, window_bounds = array<i64: 1, 1, 32>}, {transform_indices = @transform_6, window_bounds = array<i64: 1, 1, 32>}, {transform_indices = @transform_7, window_bounds = array<i64: 1, 1, 32>}, {transform_indices = @transform_8, window_bounds = array<i64: 1, 32, 96>}, {transform_indices = @transform_9, window_bounds = array<i64: 1, 1, 96>}, {transform_indices = @transform_10, window_bounds = array<i64: 1, 48, 32>}, {transform_indices = @transform_11, window_bounds = array<i64: 1, 1, 32>}, {pipeline_mode = #tpu.pipeline_mode<synchronous>, transform_indices = @transform_12, window_bounds = array<i64: 16, 32>}]} {
    %c0_i32 = arith.constant 0 : i32
    %0 = arith.cmpi eq, %arg0, %c0_i32 : i32
    %1 = arith.extui %0 : i1 to i32
    %c0_i32_0 = arith.constant 0 : i32
    %2 = arith.cmpi ne, %1, %c0_i32_0 : i32
    scf.if %2 {
      %c0_83 = arith.constant 0 : index
      %c0_84 = arith.constant 0 : index
      %215 = vector.load %arg1[%c0_83, %c0_84] : memref<16x32xf32, #tpu.memory_space<vmem>>, vector<16x32xf32>
      %c0_85 = arith.constant 0 : index
      %c0_86 = arith.constant 0 : index
      %216 = vector.load %arg13[%c0_85, %c0_86] : memref<16x32xf32, #tpu.memory_space<vmem>>, vector<16x32xf32>
      tpu.vector_store %arg13[%c0_85, %c0_86], %215 {strides = array<i32>} : memref<16x32xf32, #tpu.memory_space<vmem>>, vector<16x32xf32>,
    } else {
    }
    %c0 = arith.constant 0 : index
    %c0_1 = arith.constant 0 : index
    %3 = vector.load %arg13[%c0, %c0_1] : memref<16x32xf32, #tpu.memory_space<vmem>>, vector<16x32xf32>
    %c0_2 = arith.constant 0 : index
    %c0_3 = arith.constant 0 : index
    %c0_4 = arith.constant 0 : index
    %4 = vector.load %arg2[%c0_2, %c0_3, %c0_4] : memref<1x1x32xf32, #tpu.memory_space<vmem>>, vector<1x1x32xf32>
    %5 = vector.shape_cast %4 : vector<1x1x32xf32> to vector<1x32xf32>
    %c0_5 = arith.constant 0 : index
    %c0_6 = arith.constant 0 : index
    %c0_7 = arith.constant 0 : index
    %6 = vector.load %arg3[%c0_5, %c0_6, %c0_7] : memref<1x1x32xf32, #tpu.memory_space<vmem>>, vector<1x1x32xf32>
    %7 = vector.shape_cast %6 : vector<1x1x32xf32> to vector<1x32xf32>
    %cst = arith.constant dense<0.000000e+00> : vector<16xf32>
    %8 = vector.multi_reduction <add>, %3, %cst [1] : vector<16x32xf32> to vector<16xf32>
    %9 = vector.shape_cast %8 : vector<16xf32> to vector<16x1xf32>
    %cst_8 = arith.constant 3.200000e+01 : f32
    %10 = vector.broadcast %cst_8 : f32 to vector<16x1xf32>
    %11 = arith.divf %9, %10 : vector<16x1xf32>
    %12 = vector.broadcast %11 : vector<16x1xf32> to vector<16x32xf32>
    %13 = arith.subf %3, %12 : vector<16x32xf32>
    %14 = arith.mulf %13, %13 : vector<16x32xf32>
    %cst_9 = arith.constant dense<0.000000e+00> : vector<16xf32>
    %15 = vector.multi_reduction <add>, %14, %cst_9 [1] : vector<16x32xf32> to vector<16xf32>
    %16 = vector.shape_cast %15 : vector<16xf32> to vector<16x1xf32>
    %cst_10 = arith.constant 3.200000e+01 : f32
    %17 = vector.broadcast %cst_10 : f32 to vector<16x1xf32>
    %18 = arith.divf %16, %17 : vector<16x1xf32>
    %19 = vector.broadcast %11 : vector<16x1xf32> to vector<16x32xf32>
    %20 = arith.subf %3, %19 : vector<16x32xf32>
    %cst_11 = arith.constant 9.99999974E-6 : f32
    %21 = vector.broadcast %cst_11 : f32 to vector<16x1xf32>
    %22 = arith.addf %18, %21 : vector<16x1xf32>
    %23 = math.rsqrt %22 : vector<16x1xf32>
    %24 = vector.broadcast %23 : vector<16x1xf32> to vector<16x32xf32>
    %25 = arith.mulf %20, %24 : vector<16x32xf32>
    %26 = vector.broadcast %5 : vector<1x32xf32> to vector<16x32xf32>
    %27 = arith.mulf %25, %26 : vector<16x32xf32>
    %28 = vector.broadcast %7 : vector<1x32xf32> to vector<16x32xf32>
    %29 = arith.addf %27, %28 : vector<16x32xf32>
    %c0_12 = arith.constant 0 : index
    %c0_13 = arith.constant 0 : index
    %c0_14 = arith.constant 0 : index
    %30 = vector.load %arg4[%c0_12, %c0_13, %c0_14] : memref<1x32x96xf32, #tpu.memory_space<vmem>>, vector<1x32x96xf32>
    %31 = vector.shape_cast %30 : vector<1x32x96xf32> to vector<32x96xf32>
    %cst_15 = arith.constant dense<0.000000e+00> : vector<16x96xf32>
    %32 = tpu.matmul %29, %31, %cst_15 {dimension_numbers = #tpu.dot_dimension_numbers<[1], [0], [0], [1], [0, 0, 1, 1], [], []>} : vector<16x32xf32>, vector<32x96xf32>, vector<16x96xf32> -> vector<16x96xf32>
    %33 = vector.extract_strided_slice %32 {offsets = [0, 0], sizes = [8, 8], strides = [1, 1]} : vector<16x96xf32> to vector<8x8xf32>
    %34 = vector.extract_strided_slice %32 {offsets = [0, 32], sizes = [8, 8], strides = [1, 1]} : vector<16x96xf32> to vector<8x8xf32>
    %35 = vector.extract_strided_slice %32 {offsets = [0, 64], sizes = [8, 8], strides = [1, 1]} : vector<16x96xf32> to vector<8x8xf32>
    %cst_16 = arith.constant dense<0.000000e+00> : vector<8x8xf32>
    %36 = tpu.matmul %33, %34, %cst_16 {dimension_numbers = #tpu.dot_dimension_numbers<[1], [1], [0], [0], [0, 0, 1, 0], [], []>} : vector<8x8xf32>, vector<8x8xf32>, vector<8x8xf32> -> vector<8x8xf32>
    %cst_17 = arith.constant dense<0xFF800000> : vector<8xf32>
    %37 = vector.multi_reduction <maximumf>, %36, %cst_17 [1] : vector<8x8xf32> to vector<8xf32>
    %38 = vector.shape_cast %37 : vector<8xf32> to vector<8x1xf32>
    %39 = vector.broadcast %38 : vector<8x1xf32> to vector<8x8xf32>
    %40 = arith.subf %36, %39 : vector<8x8xf32>
    %41 = math.exp %40 : vector<8x8xf32>
    %cst_18 = arith.constant dense<0.000000e+00> : vector<8xf32>
    %42 = vector.multi_reduction <add>, %41, %cst_18 [1] : vector<8x8xf32> to vector<8xf32>
    %43 = vector.shape_cast %42 : vector<8xf32> to vector<8x1xf32>
    %44 = tpu.reciprocal %43 : vector<8x1xf32> -> vector<8x1xf32>
    %45 = vector.broadcast %44 : vector<8x1xf32> to vector<8x8xf32>
    %46 = arith.mulf %41, %45 : vector<8x8xf32>
    %cst_19 = arith.constant dense<0.000000e+00> : vector<8x8xf32>
    %47 = tpu.matmul %46, %35, %cst_19 {dimension_numbers = #tpu.dot_dimension_numbers<[1], [0], [0], [1], [0, 0, 1, 1], [], []>} : vector<8x8xf32>, vector<8x8xf32>, vector<8x8xf32> -> vector<8x8xf32>
    %48 = vector.extract_strided_slice %32 {offsets = [0, 8], sizes = [8, 8], strides = [1, 1]} : vector<16x96xf32> to vector<8x8xf32>
    %49 = vector.extract_strided_slice %32 {offsets = [0, 40], sizes = [8, 8], strides = [1, 1]} : vector<16x96xf32> to vector<8x8xf32>
    %50 = vector.extract_strided_slice %32 {offsets = [0, 72], sizes = [8, 8], strides = [1, 1]} : vector<16x96xf32> to vector<8x8xf32>
    %cst_20 = arith.constant dense<0.000000e+00> : vector<8x8xf32>
    %51 = tpu.matmul %48, %49, %cst_20 {dimension_numbers = #tpu.dot_dimension_numbers<[1], [1], [0], [0], [0, 0, 1, 0], [], []>} : vector<8x8xf32>, vector<8x8xf32>, vector<8x8xf32> -> vector<8x8xf32>
    %cst_21 = arith.constant dense<0xFF800000> : vector<8xf32>
    %52 = vector.multi_reduction <maximumf>, %51, %cst_21 [1] : vector<8x8xf32> to vector<8xf32>
    %53 = vector.shape_cast %52 : vector<8xf32> to vector<8x1xf32>
    %54 = vector.broadcast %53 : vector<8x1xf32> to vector<8x8xf32>
    %55 = arith.subf %51, %54 : vector<8x8xf32>
    %56 = math.exp %55 : vector<8x8xf32>
    %cst_22 = arith.constant dense<0.000000e+00> : vector<8xf32>
    %57 = vector.multi_reduction <add>, %56, %cst_22 [1] : vector<8x8xf32> to vector<8xf32>
    %58 = vector.shape_cast %57 : vector<8xf32> to vector<8x1xf32>
    %59 = tpu.reciprocal %58 : vector<8x1xf32> -> vector<8x1xf32>
    %60 = vector.broadcast %59 : vector<8x1xf32> to vector<8x8xf32>
    %61 = arith.mulf %56, %60 : vector<8x8xf32>
    %cst_23 = arith.constant dense<0.000000e+00> : vector<8x8xf32>
    %62 = tpu.matmul %61, %50, %cst_23 {dimension_numbers = #tpu.dot_dimension_numbers<[1], [0], [0], [1], [0, 0, 1, 1], [], []>} : vector<8x8xf32>, vector<8x8xf32>, vector<8x8xf32> -> vector<8x8xf32>
    %63 = vector.extract_strided_slice %32 {offsets = [0, 16], sizes = [8, 8], strides = [1, 1]} : vector<16x96xf32> to vector<8x8xf32>
    %64 = vector.extract_strided_slice %32 {offsets = [0, 48], sizes = [8, 8], strides = [1, 1]} : vector<16x96xf32> to vector<8x8xf32>
    %65 = vector.extract_strided_slice %32 {offsets = [0, 80], sizes = [8, 8], strides = [1, 1]} : vector<16x96xf32> to vector<8x8xf32>
    %cst_24 = arith.constant dense<0.000000e+00> : vector<8x8xf32>
    %66 = tpu.matmul %63, %64, %cst_24 {dimension_numbers = #tpu.dot_dimension_numbers<[1], [1], [0], [0], [0, 0, 1, 0], [], []>} : vector<8x8xf32>, vector<8x8xf32>, vector<8x8xf32> -> vector<8x8xf32>
    %cst_25 = arith.constant dense<0xFF800000> : vector<8xf32>
    %67 = vector.multi_reduction <maximumf>, %66, %cst_25 [1] : vector<8x8xf32> to vector<8xf32>
    %68 = vector.shape_cast %67 : vector<8xf32> to vector<8x1xf32>
    %69 = vector.broadcast %68 : vector<8x1xf32> to vector<8x8xf32>
    %70 = arith.subf %66, %69 : vector<8x8xf32>
    %71 = math.exp %70 : vector<8x8xf32>
    %cst_26 = arith.constant dense<0.000000e+00> : vector<8xf32>
    %72 = vector.multi_reduction <add>, %71, %cst_26 [1] : vector<8x8xf32> to vector<8xf32>
    %73 = vector.shape_cast %72 : vector<8xf32> to vector<8x1xf32>
    %74 = tpu.reciprocal %73 : vector<8x1xf32> -> vector<8x1xf32>
    %75 = vector.broadcast %74 : vector<8x1xf32> to vector<8x8xf32>
    %76 = arith.mulf %71, %75 : vector<8x8xf32>
    %cst_27 = arith.constant dense<0.000000e+00> : vector<8x8xf32>
    %77 = tpu.matmul %76, %65, %cst_27 {dimension_numbers = #tpu.dot_dimension_numbers<[1], [0], [0], [1], [0, 0, 1, 1], [], []>} : vector<8x8xf32>, vector<8x8xf32>, vector<8x8xf32> -> vector<8x8xf32>
    %78 = vector.extract_strided_slice %32 {offsets = [0, 24], sizes = [8, 8], strides = [1, 1]} : vector<16x96xf32> to vector<8x8xf32>
    %79 = vector.extract_strided_slice %32 {offsets = [0, 56], sizes = [8, 8], strides = [1, 1]} : vector<16x96xf32> to vector<8x8xf32>
    %80 = vector.extract_strided_slice %32 {offsets = [0, 88], sizes = [8, 8], strides = [1, 1]} : vector<16x96xf32> to vector<8x8xf32>
    %cst_28 = arith.constant dense<0.000000e+00> : vector<8x8xf32>
    %81 = tpu.matmul %78, %79, %cst_28 {dimension_numbers = #tpu.dot_dimension_numbers<[1], [1], [0], [0], [0, 0, 1, 0], [], []>} : vector<8x8xf32>, vector<8x8xf32>, vector<8x8xf32> -> vector<8x8xf32>
    %cst_29 = arith.constant dense<0xFF800000> : vector<8xf32>
    %82 = vector.multi_reduction <maximumf>, %81, %cst_29 [1] : vector<8x8xf32> to vector<8xf32>
    %83 = vector.shape_cast %82 : vector<8xf32> to vector<8x1xf32>
    %84 = vector.broadcast %83 : vector<8x1xf32> to vector<8x8xf32>
    %85 = arith.subf %81, %84 : vector<8x8xf32>
    %86 = math.exp %85 : vector<8x8xf32>
    %cst_30 = arith.constant dense<0.000000e+00> : vector<8xf32>
    %87 = vector.multi_reduction <add>, %86, %cst_30 [1] : vector<8x8xf32> to vector<8xf32>
    %88 = vector.shape_cast %87 : vector<8xf32> to vector<8x1xf32>
    %89 = tpu.reciprocal %88 : vector<8x1xf32> -> vector<8x1xf32>
    %90 = vector.broadcast %89 : vector<8x1xf32> to vector<8x8xf32>
    %91 = arith.mulf %86, %90 : vector<8x8xf32>
    %cst_31 = arith.constant dense<0.000000e+00> : vector<8x8xf32>
    %92 = tpu.matmul %91, %80, %cst_31 {dimension_numbers = #tpu.dot_dimension_numbers<[1], [0], [0], [1], [0, 0, 1, 1], [], []>} : vector<8x8xf32>, vector<8x8xf32>, vector<8x8xf32> -> vector<8x8xf32>
    %93 = tpu.concatenate %47, %62, %77, %92 in 1 : vector<8x8xf32>, vector<8x8xf32>, vector<8x8xf32>, vector<8x8xf32> -> vector<8x32xf32>
    %94 = vector.extract_strided_slice %32 {offsets = [8, 0], sizes = [8, 8], strides = [1, 1]} : vector<16x96xf32> to vector<8x8xf32>
    %95 = vector.extract_strided_slice %32 {offsets = [8, 32], sizes = [8, 8], strides = [1, 1]} : vector<16x96xf32> to vector<8x8xf32>
    %96 = vector.extract_strided_slice %32 {offsets = [8, 64], sizes = [8, 8], strides = [1, 1]} : vector<16x96xf32> to vector<8x8xf32>
    %cst_32 = arith.constant dense<0.000000e+00> : vector<8x8xf32>
    %97 = tpu.matmul %94, %95, %cst_32 {dimension_numbers = #tpu.dot_dimension_numbers<[1], [1], [0], [0], [0, 0, 1, 0], [], []>} : vector<8x8xf32>, vector<8x8xf32>, vector<8x8xf32> -> vector<8x8xf32>
    %cst_33 = arith.constant dense<0xFF800000> : vector<8xf32>
    %98 = vector.multi_reduction <maximumf>, %97, %cst_33 [1] : vector<8x8xf32> to vector<8xf32>
    %99 = vector.shape_cast %98 : vector<8xf32> to vector<8x1xf32>
    %100 = vector.broadcast %99 : vector<8x1xf32> to vector<8x8xf32>
    %101 = arith.subf %97, %100 : vector<8x8xf32>
    %102 = math.exp %101 : vector<8x8xf32>
    %cst_34 = arith.constant dense<0.000000e+00> : vector<8xf32>
    %103 = vector.multi_reduction <add>, %102, %cst_34 [1] : vector<8x8xf32> to vector<8xf32>
    %104 = vector.shape_cast %103 : vector<8xf32> to vector<8x1xf32>
    %105 = tpu.reciprocal %104 : vector<8x1xf32> -> vector<8x1xf32>
    %106 = vector.broadcast %105 : vector<8x1xf32> to vector<8x8xf32>
    %107 = arith.mulf %102, %106 : vector<8x8xf32>
    %cst_35 = arith.constant dense<0.000000e+00> : vector<8x8xf32>
    %108 = tpu.matmul %107, %96, %cst_35 {dimension_numbers = #tpu.dot_dimension_numbers<[1], [0], [0], [1], [0, 0, 1, 1], [], []>} : vector<8x8xf32>, vector<8x8xf32>, vector<8x8xf32> -> vector<8x8xf32>
    %109 = vector.extract_strided_slice %32 {offsets = [8, 8], sizes = [8, 8], strides = [1, 1]} : vector<16x96xf32> to vector<8x8xf32>
    %110 = vector.extract_strided_slice %32 {offsets = [8, 40], sizes = [8, 8], strides = [1, 1]} : vector<16x96xf32> to vector<8x8xf32>
    %111 = vector.extract_strided_slice %32 {offsets = [8, 72], sizes = [8, 8], strides = [1, 1]} : vector<16x96xf32> to vector<8x8xf32>
    %cst_36 = arith.constant dense<0.000000e+00> : vector<8x8xf32>
    %112 = tpu.matmul %109, %110, %cst_36 {dimension_numbers = #tpu.dot_dimension_numbers<[1], [1], [0], [0], [0, 0, 1, 0], [], []>} : vector<8x8xf32>, vector<8x8xf32>, vector<8x8xf32> -> vector<8x8xf32>
    %cst_37 = arith.constant dense<0xFF800000> : vector<8xf32>
    %113 = vector.multi_reduction <maximumf>, %112, %cst_37 [1] : vector<8x8xf32> to vector<8xf32>
    %114 = vector.shape_cast %113 : vector<8xf32> to vector<8x1xf32>
    %115 = vector.broadcast %114 : vector<8x1xf32> to vector<8x8xf32>
    %116 = arith.subf %112, %115 : vector<8x8xf32>
    %117 = math.exp %116 : vector<8x8xf32>
    %cst_38 = arith.constant dense<0.000000e+00> : vector<8xf32>
    %118 = vector.multi_reduction <add>, %117, %cst_38 [1] : vector<8x8xf32> to vector<8xf32>
    %119 = vector.shape_cast %118 : vector<8xf32> to vector<8x1xf32>
    %120 = tpu.reciprocal %119 : vector<8x1xf32> -> vector<8x1xf32>
    %121 = vector.broadcast %120 : vector<8x1xf32> to vector<8x8xf32>
    %122 = arith.mulf %117, %121 : vector<8x8xf32>
    %cst_39 = arith.constant dense<0.000000e+00> : vector<8x8xf32>
    %123 = tpu.matmul %122, %111, %cst_39 {dimension_numbers = #tpu.dot_dimension_numbers<[1], [0], [0], [1], [0, 0, 1, 1], [], []>} : vector<8x8xf32>, vector<8x8xf32>, vector<8x8xf32> -> vector<8x8xf32>
    %124 = vector.extract_strided_slice %32 {offsets = [8, 16], sizes = [8, 8], strides = [1, 1]} : vector<16x96xf32> to vector<8x8xf32>
    %125 = vector.extract_strided_slice %32 {offsets = [8, 48], sizes = [8, 8], strides = [1, 1]} : vector<16x96xf32> to vector<8x8xf32>
    %126 = vector.extract_strided_slice %32 {offsets = [8, 80], sizes = [8, 8], strides = [1, 1]} : vector<16x96xf32> to vector<8x8xf32>
    %cst_40 = arith.constant dense<0.000000e+00> : vector<8x8xf32>
    %127 = tpu.matmul %124, %125, %cst_40 {dimension_numbers = #tpu.dot_dimension_numbers<[1], [1], [0], [0], [0, 0, 1, 0], [], []>} : vector<8x8xf32>, vector<8x8xf32>, vector<8x8xf32> -> vector<8x8xf32>
    %cst_41 = arith.constant dense<0xFF800000> : vector<8xf32>
    %128 = vector.multi_reduction <maximumf>, %127, %cst_41 [1] : vector<8x8xf32> to vector<8xf32>
    %129 = vector.shape_cast %128 : vector<8xf32> to vector<8x1xf32>
    %130 = vector.broadcast %129 : vector<8x1xf32> to vector<8x8xf32>
    %131 = arith.subf %127, %130 : vector<8x8xf32>
    %132 = math.exp %131 : vector<8x8xf32>
    %cst_42 = arith.constant dense<0.000000e+00> : vector<8xf32>
    %133 = vector.multi_reduction <add>, %132, %cst_42 [1] : vector<8x8xf32> to vector<8xf32>
    %134 = vector.shape_cast %133 : vector<8xf32> to vector<8x1xf32>
    %135 = tpu.reciprocal %134 : vector<8x1xf32> -> vector<8x1xf32>
    %136 = vector.broadcast %135 : vector<8x1xf32> to vector<8x8xf32>
    %137 = arith.mulf %132, %136 : vector<8x8xf32>
    %cst_43 = arith.constant dense<0.000000e+00> : vector<8x8xf32>
    %138 = tpu.matmul %137, %126, %cst_43 {dimension_numbers = #tpu.dot_dimension_numbers<[1], [0], [0], [1], [0, 0, 1, 1], [], []>} : vector<8x8xf32>, vector<8x8xf32>, vector<8x8xf32> -> vector<8x8xf32>
    %139 = vector.extract_strided_slice %32 {offsets = [8, 24], sizes = [8, 8], strides = [1, 1]} : vector<16x96xf32> to vector<8x8xf32>
    %140 = vector.extract_strided_slice %32 {offsets = [8, 56], sizes = [8, 8], strides = [1, 1]} : vector<16x96xf32> to vector<8x8xf32>
    %141 = vector.extract_strided_slice %32 {offsets = [8, 88], sizes = [8, 8], strides = [1, 1]} : vector<16x96xf32> to vector<8x8xf32>
    %cst_44 = arith.constant dense<0.000000e+00> : vector<8x8xf32>
    %142 = tpu.matmul %139, %140, %cst_44 {dimension_numbers = #tpu.dot_dimension_numbers<[1], [1], [0], [0], [0, 0, 1, 0], [], []>} : vector<8x8xf32>, vector<8x8xf32>, vector<8x8xf32> -> vector<8x8xf32>
    %cst_45 = arith.constant dense<0xFF800000> : vector<8xf32>
    %143 = vector.multi_reduction <maximumf>, %142, %cst_45 [1] : vector<8x8xf32> to vector<8xf32>
    %144 = vector.shape_cast %143 : vector<8xf32> to vector<8x1xf32>
    %145 = vector.broadcast %144 : vector<8x1xf32> to vector<8x8xf32>
    %146 = arith.subf %142, %145 : vector<8x8xf32>
    %147 = math.exp %146 : vector<8x8xf32>
    %cst_46 = arith.constant dense<0.000000e+00> : vector<8xf32>
    %148 = vector.multi_reduction <add>, %147, %cst_46 [1] : vector<8x8xf32> to vector<8xf32>
    %149 = vector.shape_cast %148 : vector<8xf32> to vector<8x1xf32>
    %150 = tpu.reciprocal %149 : vector<8x1xf32> -> vector<8x1xf32>
    %151 = vector.broadcast %150 : vector<8x1xf32> to vector<8x8xf32>
    %152 = arith.mulf %147, %151 : vector<8x8xf32>
    %cst_47 = arith.constant dense<0.000000e+00> : vector<8x8xf32>
    %153 = tpu.matmul %152, %141, %cst_47 {dimension_numbers = #tpu.dot_dimension_numbers<[1], [0], [0], [1], [0, 0, 1, 1], [], []>} : vector<8x8xf32>, vector<8x8xf32>, vector<8x8xf32> -> vector<8x8xf32>
    %154 = tpu.concatenate %108, %123, %138, %153 in 1 : vector<8x8xf32>, vector<8x8xf32>, vector<8x8xf32>, vector<8x8xf32> -> vector<8x32xf32>
    %155 = tpu.concatenate %93, %154 in 0 : vector<8x32xf32>, vector<8x32xf32> -> vector<16x32xf32>
    %c0_48 = arith.constant 0 : index
    %c0_49 = arith.constant 0 : index
    %c0_50 = arith.constant 0 : index
    %156 = vector.load %arg5[%c0_48, %c0_49, %c0_50] : memref<1x32x32xf32, #tpu.memory_space<vmem>>, vector<1x32x32xf32>
    %157 = vector.shape_cast %156 : vector<1x32x32xf32> to vector<32x32xf32>
    %cst_51 = arith.constant dense<0.000000e+00> : vector<16x32xf32>
    %158 = tpu.matmul %155, %157, %cst_51 {dimension_numbers = #tpu.dot_dimension_numbers<[1], [0], [0], [1], [0, 0, 1, 1], [], []>} : vector<16x32xf32>, vector<32x32xf32>, vector<16x32xf32> -> vector<16x32xf32>
    %159 = arith.addf %3, %158 : vector<16x32xf32>
    %c0_52 = arith.constant 0 : index
    %c0_53 = arith.constant 0 : index
    %c0_54 = arith.constant 0 : index
    %160 = vector.load %arg6[%c0_52, %c0_53, %c0_54] : memref<1x1x32xf32, #tpu.memory_space<vmem>>, vector<1x1x32xf32>
    %161 = vector.shape_cast %160 : vector<1x1x32xf32> to vector<1x32xf32>
    %162 = vector.broadcast %161 : vector<1x32xf32> to vector<16x32xf32>
    %163 = arith.addf %159, %162 : vector<16x32xf32>
    %c0_55 = arith.constant 0 : index
    %c0_56 = arith.constant 0 : index
    %c0_57 = arith.constant 0 : index
    %164 = vector.load %arg7[%c0_55, %c0_56, %c0_57] : memref<1x1x32xf32, #tpu.memory_space<vmem>>, vector<1x1x32xf32>
    %165 = vector.shape_cast %164 : vector<1x1x32xf32> to vector<1x32xf32>
    %c0_58 = arith.constant 0 : index
    %c0_59 = arith.constant 0 : index
    %c0_60 = arith.constant 0 : index
    %166 = vector.load %arg8[%c0_58, %c0_59, %c0_60] : memref<1x1x32xf32, #tpu.memory_space<vmem>>, vector<1x1x32xf32>
    %167 = vector.shape_cast %166 : vector<1x1x32xf32> to vector<1x32xf32>
    %cst_61 = arith.constant dense<0.000000e+00> : vector<16xf32>
    %168 = vector.multi_reduction <add>, %163, %cst_61 [1] : vector<16x32xf32> to vector<16xf32>
    %169 = vector.shape_cast %168 : vector<16xf32> to vector<16x1xf32>
    %cst_62 = arith.constant 3.200000e+01 : f32
    %170 = vector.broadcast %cst_62 : f32 to vector<16x1xf32>
    %171 = arith.divf %169, %170 : vector<16x1xf32>
    %172 = vector.broadcast %171 : vector<16x1xf32> to vector<16x32xf32>
    %173 = arith.subf %163, %172 : vector<16x32xf32>
    %174 = arith.mulf %173, %173 : vector<16x32xf32>
    %cst_63 = arith.constant dense<0.000000e+00> : vector<16xf32>
    %175 = vector.multi_reduction <add>, %174, %cst_63 [1] : vector<16x32xf32> to vector<16xf32>
    %176 = vector.shape_cast %175 : vector<16xf32> to vector<16x1xf32>
    %cst_64 = arith.constant 3.200000e+01 : f32
    %177 = vector.broadcast %cst_64 : f32 to vector<16x1xf32>
    %178 = arith.divf %176, %177 : vector<16x1xf32>
    %179 = vector.broadcast %171 : vector<16x1xf32> to vector<16x32xf32>
    %180 = arith.subf %163, %179 : vector<16x32xf32>
    %cst_65 = arith.constant 9.99999974E-6 : f32
    %181 = vector.broadcast %cst_65 : f32 to vector<16x1xf32>
    %182 = arith.addf %178, %181 : vector<16x1xf32>
    %183 = math.rsqrt %182 : vector<16x1xf32>
    %184 = vector.broadcast %183 : vector<16x1xf32> to vector<16x32xf32>
    %185 = arith.mulf %180, %184 : vector<16x32xf32>
    %186 = vector.broadcast %165 : vector<1x32xf32> to vector<16x32xf32>
    %187 = arith.mulf %185, %186 : vector<16x32xf32>
    %188 = vector.broadcast %167 : vector<1x32xf32> to vector<16x32xf32>
    %189 = arith.addf %187, %188 : vector<16x32xf32>
    %c0_66 = arith.constant 0 : index
    %c0_67 = arith.constant 0 : index
    %c0_68 = arith.constant 0 : index
    %190 = vector.load %arg9[%c0_66, %c0_67, %c0_68] : memref<1x32x96xf32, #tpu.memory_space<vmem>>, vector<1x32x96xf32>
    %191 = vector.shape_cast %190 : vector<1x32x96xf32> to vector<32x96xf32>
    %cst_69 = arith.constant dense<0.000000e+00> : vector<16x96xf32>
    %192 = tpu.matmul %189, %191, %cst_69 {dimension_numbers = #tpu.dot_dimension_numbers<[1], [0], [0], [1], [0, 0, 1, 1], [], []>} : vector<16x32xf32>, vector<32x96xf32>, vector<16x96xf32> -> vector<16x96xf32>
    %c0_70 = arith.constant 0 : index
    %c0_71 = arith.constant 0 : index
    %c0_72 = arith.constant 0 : index
    %193 = vector.load %arg10[%c0_70, %c0_71, %c0_72] : memref<1x1x96xf32, #tpu.memory_space<vmem>>, vector<1x1x96xf32>
    %194 = vector.shape_cast %193 : vector<1x1x96xf32> to vector<1x96xf32>
    %195 = vector.broadcast %194 : vector<1x96xf32> to vector<16x96xf32>
    %196 = arith.addf %192, %195 : vector<16x96xf32>
    %197 = vector.extract_strided_slice %196 {offsets = [0, 0], sizes = [16, 48], strides = [1, 1]} : vector<16x96xf32> to vector<16x48xf32>
    %198 = vector.extract_strided_slice %196 {offsets = [0, 48], sizes = [16, 48], strides = [1, 1]} : vector<16x96xf32> to vector<16x48xf32>
    %199 = arith.negf %197 : vector<16x48xf32>
    %200 = math.exp %199 : vector<16x48xf32>
    %cst_73 = arith.constant 1.000000e+00 : f32
    %201 = vector.broadcast %cst_73 : f32 to vector<16x48xf32>
    %202 = arith.addf %201, %200 : vector<16x48xf32>
    %203 = arith.divf %201, %202 : vector<16x48xf32>
    %204 = arith.mulf %197, %203 : vector<16x48xf32>
    %205 = arith.mulf %204, %198 : vector<16x48xf32>
    %c0_74 = arith.constant 0 : index
    %c0_75 = arith.constant 0 : index
    %c0_76 = arith.constant 0 : index
    %206 = vector.load %arg11[%c0_74, %c0_75, %c0_76] : memref<1x48x32xf32, #tpu.memory_space<vmem>>, vector<1x48x32xf32>
    %207 = vector.shape_cast %206 : vector<1x48x32xf32> to vector<48x32xf32>
    %cst_77 = arith.constant dense<0.000000e+00> : vector<16x32xf32>
    %208 = tpu.matmul %205, %207, %cst_77 {dimension_numbers = #tpu.dot_dimension_numbers<[1], [0], [0], [1], [0, 0, 1, 1], [], []>} : vector<16x48xf32>, vector<48x32xf32>, vector<16x32xf32> -> vector<16x32xf32>
    %c0_78 = arith.constant 0 : index
    %c0_79 = arith.constant 0 : index
    %c0_80 = arith.constant 0 : index
    %209 = vector.load %arg12[%c0_78, %c0_79, %c0_80] : memref<1x1x32xf32, #tpu.memory_space<vmem>>, vector<1x1x32xf32>
    %210 = vector.shape_cast %209 : vector<1x1x32xf32> to vector<1x32xf32>
    %211 = vector.broadcast %210 : vector<1x32xf32> to vector<16x32xf32>
    %212 = arith.addf %208, %211 : vector<16x32xf32>
    %213 = arith.addf %163, %212 : vector<16x32xf32>
    %c0_81 = arith.constant 0 : index
    %c0_82 = arith.constant 0 : index
    %214 = vector.load %arg13[%c0_81, %c0_82] : memref<16x32xf32, #tpu.memory_space<vmem>>, vector<16x32xf32>
    tpu.vector_store %arg13[%c0_81, %c0_82], %213 {strides = array<i32>} : memref<16x32xf32, #tpu.memory_space<vmem>>, vector<16x32xf32>,
    return
  }
  func.func @transform_0(%arg0: i32) -> (i32, i32) {
    %c0_i32 = arith.constant 0 : i32
    %c0_i32_0 = arith.constant 0 : i32
    %c0_i32_1 = arith.constant 0 : i32
    return %c0_i32, %c0_i32_0 : i32, i32
  }
  func.func @transform_1(%arg0: i32) -> (i32, i32, i32) {
    %c0_i32 = arith.constant 0 : i32
    %c0_i32_0 = arith.constant 0 : i32
    %c0_i32_1 = arith.constant 0 : i32
    return %arg0, %c0_i32, %c0_i32_0 : i32, i32, i32
  }
  func.func @transform_2(%arg0: i32) -> (i32, i32, i32) {
    %c0_i32 = arith.constant 0 : i32
    %c0_i32_0 = arith.constant 0 : i32
    %c0_i32_1 = arith.constant 0 : i32
    return %arg0, %c0_i32, %c0_i32_0 : i32, i32, i32
  }
  func.func @transform_3(%arg0: i32) -> (i32, i32, i32) {
    %c0_i32 = arith.constant 0 : i32
    %c0_i32_0 = arith.constant 0 : i32
    %c0_i32_1 = arith.constant 0 : i32
    return %arg0, %c0_i32, %c0_i32_0 : i32, i32, i32
  }
  func.func @transform_4(%arg0: i32) -> (i32, i32, i32) {
    %c0_i32 = arith.constant 0 : i32
    %c0_i32_0 = arith.constant 0 : i32
    %c0_i32_1 = arith.constant 0 : i32
    return %arg0, %c0_i32, %c0_i32_0 : i32, i32, i32
  }
  func.func @transform_5(%arg0: i32) -> (i32, i32, i32) {
    %c0_i32 = arith.constant 0 : i32
    %c0_i32_0 = arith.constant 0 : i32
    %c0_i32_1 = arith.constant 0 : i32
    return %arg0, %c0_i32, %c0_i32_0 : i32, i32, i32
  }
  func.func @transform_6(%arg0: i32) -> (i32, i32, i32) {
    %c0_i32 = arith.constant 0 : i32
    %c0_i32_0 = arith.constant 0 : i32
    %c0_i32_1 = arith.constant 0 : i32
    return %arg0, %c0_i32, %c0_i32_0 : i32, i32, i32
  }
  func.func @transform_7(%arg0: i32) -> (i32, i32, i32) {
    %c0_i32 = arith.constant 0 : i32
    %c0_i32_0 = arith.constant 0 : i32
    %c0_i32_1 = arith.constant 0 : i32
    return %arg0, %c0_i32, %c0_i32_0 : i32, i32, i32
  }
  func.func @transform_8(%arg0: i32) -> (i32, i32, i32) {
    %c0_i32 = arith.constant 0 : i32
    %c0_i32_0 = arith.constant 0 : i32
    %c0_i32_1 = arith.constant 0 : i32
    return %arg0, %c0_i32, %c0_i32_0 : i32, i32, i32
  }
  func.func @transform_9(%arg0: i32) -> (i32, i32, i32) {
    %c0_i32 = arith.constant 0 : i32
    %c0_i32_0 = arith.constant 0 : i32
    %c0_i32_1 = arith.constant 0 : i32
    return %arg0, %c0_i32, %c0_i32_0 : i32, i32, i32
  }
  func.func @transform_10(%arg0: i32) -> (i32, i32, i32) {
    %c0_i32 = arith.constant 0 : i32
    %c0_i32_0 = arith.constant 0 : i32
    %c0_i32_1 = arith.constant 0 : i32
    return %arg0, %c0_i32, %c0_i32_0 : i32, i32, i32
  }
  func.func @transform_11(%arg0: i32) -> (i32, i32, i32) {
    %c0_i32 = arith.constant 0 : i32
    %c0_i32_0 = arith.constant 0 : i32
    %c0_i32_1 = arith.constant 0 : i32
    return %arg0, %c0_i32, %c0_i32_0 : i32, i32, i32
  }
  func.func @transform_12(%arg0: i32) -> (i32, i32) {
    %c0_i32 = arith.constant 0 : i32
    %c0_i32_0 = arith.constant 0 : i32
    %c0_i32_1 = arith.constant 0 : i32
    return %c0_i32, %c0_i32_0 : i32, i32
  }
}

</mosaic_0001>

<llo_original>
// kernel: tpu_custom_call.1
$region0: #{tpu_custom_call.1}
  #allocation0 [shape = 'u32[]', space=smem, size = 0x4, offset = 0x4, fixed_abs, tag = 'smem constant byte address 0x4 - core index']
  #allocation1 [shape = 'u32[72,128]{1,0:T(1,128)}', space=vmem, size = 0x9000, scoped, tag = 'internal scratch']
  %s0 = inlined_call_operand.vmem [shape: f32[16,32], index: 0, kind: input, shape index: {}]
  %s1 = inlined_call_operand.vmem [shape: f32[2,1,32], index: 1, kind: input, shape index: {}]
  %s2 = inlined_call_operand.vmem [shape: f32[2,1,32], index: 2, kind: input, shape index: {}]
  %s3 = inlined_call_operand.vmem [shape: f32[2,32,96], index: 3, kind: input, shape index: {}]
  %s4 = inlined_call_operand.vmem [shape: f32[2,32,32], index: 4, kind: input, shape index: {}]
  %s5 = inlined_call_operand.vmem [shape: f32[2,1,32], index: 5, kind: input, shape index: {}]
  %s6 = inlined_call_operand.vmem [shape: f32[2,1,32], index: 6, kind: input, shape index: {}]
  %s7 = inlined_call_operand.vmem [shape: f32[2,1,32], index: 7, kind: input, shape index: {}]
  %s8 = inlined_call_operand.hbm [shape: f32[2,32,96], index: 8, kind: input, shape index: {}]
  %s9 = inlined_call_operand.vmem [shape: f32[2,1,96], index: 9, kind: input, shape index: {}]
  %s10 = inlined_call_operand.vmem [shape: f32[2,48,32], index: 10, kind: input, shape index: {}]
  %s11 = inlined_call_operand.vmem [shape: f32[2,1,32], index: 11, kind: input, shape index: {}]
  %s12 = inlined_call_operand.hbm [shape: f32[16,32], index: 12, kind: output, shape index: {}]
  %s13 = sld [smem:[#allocation0]]
  $region89: #{tpu_custom_call.1} parent=0
    _
  %s15 = ssub.s32 1, %s13
  %s16 = scalar_select 0, %s15, %s13
  $region1: #{tpu_custom_call.1} parent=0
    #allocation2 [shape = 'u8[32768]{0}', space=vmem, size = 0x8000, scoped, tag = 'input window, operand 8']
    #allocation3 [shape = 's32[2]{0}', space=sflag, size = 0x8, scoped, tag = 'scoped memory for tpu_custom_call.1']
    #allocation4 [shape = 's32[2]{0}', space=sflag, size = 0x8, scoped, tag = 'scoped memory for tpu_custom_call.1']
    #allocation5 [shape = 'u8[8192]{0}', space=vmem, size = 0x2000, scoped, tag = 'output window, operand 0, single buffered']
    %17 = vsyncpa [#allocation3], 0
    %s18 = scalar_lea.sflag [#allocation3], 1
    %19 = vsyncpa %s18, 0
    %20 = vsyncpa [#allocation4], 0
    loop: start=0, step=1, limit=4
    $region2: #{tpu_custom_call.1} parent=1 // loop_pre_header
      _
    $region3: #{tpu_custom_call.1} parent=1 // loop_header
      %s22 = sphi 0, %s26
      %p23 = scmp.ge.s32.totalorder %s22, 4
      %s30 = sphi 0, %s30
      %s32 = sphi 0, %s30
      %s33 = sphi 0, %s32
      %s47 = sphi 0, %s33
      %s53 = sphi 0, %s55
      %s56 = sphi 0, %s53
      %s57 = sphi 0, %s56
      %s73 = sphi 0, %s57
      %s79 = sphi 0, %s81
      %s82 = sphi 0, %s79
      %s83 = sphi 0, %s82
      %s99 = sphi 0, %s83
      %s105 = sphi 0, %s107
      %s108 = sphi 0, %s105
      %s109 = sphi 0, %s108
      %s125 = sphi 0, %s109
      %s131 = sphi 0, %s133
      %s134 = sphi 0, %s131
      %s135 = sphi 0, %s134
      %s151 = sphi 0, %s135
      %s157 = sphi 0, %s159
      %s160 = sphi 0, %s157
      %s161 = sphi 0, %s160
      %s177 = sphi 0, %s161
      %s183 = sphi 0, %s185
      %s186 = sphi 0, %s183
      %s187 = sphi 0, %s186
      %s203 = sphi 0, %s187
      %s209 = sphi 0, %s211
      %s212 = sphi 0, %s209
      %s213 = sphi 0, %s212
      %s229 = sphi 0, %s213
      %s235 = sphi 0, %s237
      %s238 = sphi 0, %s235
      %s239 = sphi 0, %s238
      %s255 = sphi 0, %s239
      %s261 = sphi 0, %s263
      %s264 = sphi 0, %s261
      %s265 = sphi 0, %s264
      %s281 = sphi 0, %s265
      %s287 = sphi 0, %s289
      %s290 = sphi 0, %s287
      %s291 = sphi 0, %s290
      %s307 = sphi 0, %s291
      %s313 = sphi 0, %s315
      %s316 = sphi 0, %s313
      %s317 = sphi 0, %s316
      %s333 = sphi 0, %s317
      %s337 = sphi 0, %s337
      %s339 = sphi 0, %s337
      %s340 = sphi 0, %s339
      %s354 = sphi 0, %s340
    $region4: #{tpu_custom_call.1} parent=1 // loop_header_branch
      %25 = sbr.rel (%p23) target = $region8
    $region5: #{tpu_custom_call.1} parent=1 // loop_body
      %s27 = ssub.s32 %s22, 1
      %s28 = ssub.s32 %s22, 2
      %s29 = sadd.s32 %s22, 1
      %s31 = sadd.s32 %s30, 1
      %p34 = scmp.eq.s32.totalorder %s22, 1
      %p35 = scmp.ne.s32.totalorder %s30, %s32
      %p36 = scmp.eq.s32.totalorder %s22, 0
      %p37 = por %p35, %p36
      %p38 = scmp.ne.s32.totalorder %s30, %s32
      %p39 = scmp.eq.s32.totalorder %s27, 1
      %p40 = por %p38, %p39
      %p41 = scmp.ne.s32.totalorder %s32, %s33
      %p42 = scmp.eq.s32.totalorder %s27, 0
      %p43 = por %p41, %p42
      %p44 = scmp.ne.s32.totalorder %s32, %s33
      %p45 = scmp.eq.s32.totalorder %s28, 1
      %p46 = por %p44, %p45
      %p48 = scmp.ne.s32.totalorder %s33, %s47
      %p49 = scmp.eq.s32.totalorder %s28, 0
      %p50 = por %p48, %p49
      %s51 = ssub.s32 %s22, %s29
      %p52 = scmp.eq.s32.totalorder %s51, 0
      %s54 = sadd.s32 %s53, 1
      %s55 = scalar_select %p52, %s53, %s54
      %p58 = pneg %p52
      %p59 = scmp.eq.s32.totalorder %s22, 1
      %p60 = por %p58, %p59
      %p61 = scmp.ne.s32.totalorder %s53, %s56
      %p62 = scmp.eq.s32.totalorder %s22, 0
      %p63 = por %p61, %p62
      %p64 = scmp.ne.s32.totalorder %s53, %s56
      %p65 = scmp.eq.s32.totalorder %s27, 1
      %p66 = por %p64, %p65
      %p67 = scmp.ne.s32.totalorder %s56, %s57
      %p68 = scmp.eq.s32.totalorder %s27, 0
      %p69 = por %p67, %p68
      %p70 = scmp.ne.s32.totalorder %s56, %s57
      %p71 = scmp.eq.s32.totalorder %s28, 1
      %p72 = por %p70, %p71
      %p74 = scmp.ne.s32.totalorder %s57, %s73
      %p75 = scmp.eq.s32.totalorder %s28, 0
      %p76 = por %p74, %p75
      %s77 = ssub.s32 %s22, %s29
      %p78 = scmp.eq.s32.totalorder %s77, 0
      %s80 = sadd.s32 %s79, 1
      %s81 = scalar_select %p78, %s79, %s80
      %p84 = pneg %p78
      %p85 = scmp.eq.s32.totalorder %s22, 1
      %p86 = por %p84, %p85
      %p87 = scmp.ne.s32.totalorder %s79, %s82
      %p88 = scmp.eq.s32.totalorder %s22, 0
      %p89 = por %p87, %p88
      %p90 = scmp.ne.s32.totalorder %s79, %s82
      %p91 = scmp.eq.s32.totalorder %s27, 1
      %p92 = por %p90, %p91
      %p93 = scmp.ne.s32.totalorder %s82, %s83
      %p94 = scmp.eq.s32.totalorder %s27, 0
      %p95 = por %p93, %p94
      %p96 = scmp.ne.s32.totalorder %s82, %s83
      %p97 = scmp.eq.s32.totalorder %s28, 1
      %p98 = por %p96, %p97
      %p100 = scmp.ne.s32.totalorder %s83, %s99
      %p101 = scmp.eq.s32.totalorder %s28, 0
      %p102 = por %p100, %p101
      %s103 = ssub.s32 %s22, %s29
      %p104 = scmp.eq.s32.totalorder %s103, 0
      %s106 = sadd.s32 %s105, 1
      %s107 = scalar_select %p104, %s105, %s106
      %p110 = pneg %p104
      %p111 = scmp.eq.s32.totalorder %s22, 1
      %p112 = por %p110, %p111
      %p113 = scmp.ne.s32.totalorder %s105, %s108
      %p114 = scmp.eq.s32.totalorder %s22, 0
      %p115 = por %p113, %p114
      %p116 = scmp.ne.s32.totalorder %s105, %s108
      %p117 = scmp.eq.s32.totalorder %s27, 1
      %p118 = por %p116, %p117
      %p119 = scmp.ne.s32.totalorder %s108, %s109
      %p120 = scmp.eq.s32.totalorder %s27, 0
      %p121 = por %p119, %p120
      %p122 = scmp.ne.s32.totalorder %s108, %s109
      %p123 = scmp.eq.s32.totalorder %s28, 1
      %p124 = por %p122, %p123
      %p126 = scmp.ne.s32.totalorder %s109, %s125
      %p127 = scmp.eq.s32.totalorder %s28, 0
      %p128 = por %p126, %p127
      %s129 = ssub.s32 %s22, %s29
      %p130 = scmp.eq.s32.totalorder %s129, 0
      %s132 = sadd.s32 %s131, 1
      %s133 = scalar_select %p130, %s131, %s132
      %p136 = pneg %p130
      %p137 = scmp.eq.s32.totalorder %s22, 1
      %p138 = por %p136, %p137
      %p139 = scmp.ne.s32.totalorder %s131, %s134
      %p140 = scmp.eq.s32.totalorder %s22, 0
      %p141 = por %p139, %p140
      %p142 = scmp.ne.s32.totalorder %s131, %s134
      %p143 = scmp.eq.s32.totalorder %s27, 1
      %p144 = por %p142, %p143
      %p145 = scmp.ne.s32.totalorder %s134, %s135
      %p146 = scmp.eq.s32.totalorder %s27, 0
      %p147 = por %p145, %p146
      %p148 = scmp.ne.s32.totalorder %s134, %s135
      %p149 = scmp.eq.s32.totalorder %s28, 1
      %p150 = por %p148, %p149
      %p152 = scmp.ne.s32.totalorder %s135, %s151
      %p153 = scmp.eq.s32.totalorder %s28, 0
      %p154 = por %p152, %p153
      %s155 = ssub.s32 %s22, %s29
      %p156 = scmp.eq.s32.totalorder %s155, 0
      %s158 = sadd.s32 %s157, 1
      %s159 = scalar_select %p156, %s157, %s158
      %p162 = pneg %p156
      %p163 = scmp.eq.s32.totalorder %s22, 1
      %p164 = por %p162, %p163
      %p165 = scmp.ne.s32.totalorder %s157, %s160
      %p166 = scmp.eq.s32.totalorder %s22, 0
      %p167 = por %p165, %p166
      %p168 = scmp.ne.s32.totalorder %s157, %s160
      %p169 = scmp.eq.s32.totalorder %s27, 1
      %p170 = por %p168, %p169
      %p171 = scmp.ne.s32.totalorder %s160, %s161
      %p172 = scmp.eq.s32.totalorder %s27, 0
      %p173 = por %p171, %p172
      %p174 = scmp.ne.s32.totalorder %s160, %s161
      %p175 = scmp.eq.s32.totalorder %s28, 1
      %p176 = por %p174, %p175
      %p178 = scmp.ne.s32.totalorder %s161, %s177
      %p179 = scmp.eq.s32.totalorder %s28, 0
      %p180 = por %p178, %p179
      %s181 = ssub.s32 %s22, %s29
      %p182 = scmp.eq.s32.totalorder %s181, 0
      %s184 = sadd.s32 %s183, 1
      %s185 = scalar_select %p182, %s183, %s184
      %p188 = pneg %p182
      %p189 = scmp.eq.s32.totalorder %s22, 1
      %p190 = por %p188, %p189
      %p191 = scmp.ne.s32.totalorder %s183, %s186
      %p192 = scmp.eq.s32.totalorder %s22, 0
      %p193 = por %p191, %p192
      %p194 = scmp.ne.s32.totalorder %s183, %s186
      %p195 = scmp.eq.s32.totalorder %s27, 1
      %p196 = por %p194, %p195
      %p197 = scmp.ne.s32.totalorder %s186, %s187
      %p198 = scmp.eq.s32.totalorder %s27, 0
      %p199 = por %p197, %p198
      %p200 = scmp.ne.s32.totalorder %s186, %s187
      %p201 = scmp.eq.s32.totalorder %s28, 1
      %p202 = por %p200, %p201
      %p204 = scmp.ne.s32.totalorder %s187, %s203
      %p205 = scmp.eq.s32.totalorder %s28, 0
      %p206 = por %p204, %p205
      %s207 = ssub.s32 %s22, %s29
      %p208 = scmp.eq.s32.totalorder %s207, 0
      %s210 = sadd.s32 %s209, 1
      %s211 = scalar_select %p208, %s209, %s210
      %p214 = pneg %p208
      %p215 = scmp.eq.s32.totalorder %s22, 1
      %p216 = por %p214, %p215
      %p217 = scmp.ne.s32.totalorder %s209, %s212
      %p218 = scmp.eq.s32.totalorder %s22, 0
      %p219 = por %p217, %p218
      %p220 = scmp.ne.s32.totalorder %s209, %s212
      %p221 = scmp.eq.s32.totalorder %s27, 1
      %p222 = por %p220, %p221
      %p223 = scmp.ne.s32.totalorder %s212, %s213
      %p224 = scmp.eq.s32.totalorder %s27, 0
      %p225 = por %p223, %p224
      %p226 = scmp.ne.s32.totalorder %s212, %s213
      %p227 = scmp.eq.s32.totalorder %s28, 1
      %p228 = por %p226, %p227
      %p230 = scmp.ne.s32.totalorder %s213, %s229
      %p231 = scmp.eq.s32.totalorder %s28, 0
      %p232 = por %p230, %p231
      %s233 = ssub.s32 %s22, %s29
      %p234 = scmp.eq.s32.totalorder %s233, 0
      %s236 = sadd.s32 %s235, 1
      %s237 = scalar_select %p234, %s235, %s236
      %p240 = pneg %p234
      %p241 = scmp.eq.s32.totalorder %s22, 1
      %p242 = por %p240, %p241
      %p243 = scmp.ne.s32.totalorder %s235, %s238
      %p244 = scmp.eq.s32.totalorder %s22, 0
      %p245 = por %p243, %p244
      %p246 = scmp.ne.s32.totalorder %s235, %s238
      %p247 = scmp.eq.s32.totalorder %s27, 1
      %p248 = por %p246, %p247
      %p249 = scmp.ne.s32.totalorder %s238, %s239
      %p250 = scmp.eq.s32.totalorder %s27, 0
      %p251 = por %p249, %p250
      %p252 = scmp.ne.s32.totalorder %s238, %s239
      %p253 = scmp.eq.s32.totalorder %s28, 1
      %p254 = por %p252, %p253
      %p256 = scmp.ne.s32.totalorder %s239, %s255
      %p257 = scmp.eq.s32.totalorder %s28, 0
      %p258 = por %p256, %p257
      %s259 = ssub.s32 %s22, %s29
      %p260 = scmp.eq.s32.totalorder %s259, 0
      %s262 = sadd.s32 %s261, 1
      %s263 = scalar_select %p260, %s261, %s262
      %p266 = pneg %p260
      %p267 = scmp.eq.s32.totalorder %s22, 1
      %p268 = por %p266, %p267
      %p269 = scmp.ne.s32.totalorder %s261, %s264
      %p270 = scmp.eq.s32.totalorder %s22, 0
      %p271 = por %p269, %p270
      %p272 = scmp.ne.s32.totalorder %s261, %s264
      %p273 = scmp.eq.s32.totalorder %s27, 1
      %p274 = por %p272, %p273
      %p275 = scmp.ne.s32.totalorder %s264, %s265
      %p276 = scmp.eq.s32.totalorder %s27, 0
      %p277 = por %p275, %p276
      %p278 = scmp.ne.s32.totalorder %s264, %s265
      %p279 = scmp.eq.s32.totalorder %s28, 1
      %p280 = por %p278, %p279
      %p282 = scmp.ne.s32.totalorder %s265, %s281
      %p283 = scmp.eq.s32.totalorder %s28, 0
      %p284 = por %p282, %p283
      %s285 = ssub.s32 %s22, %s29
      %p286 = scmp.eq.s32.totalorder %s285, 0
      %s288 = sadd.s32 %s287, 1
      %s289 = scalar_select %p286, %s287, %s288
      %p292 = pneg %p286
      %p293 = scmp.eq.s32.totalorder %s22, 1
      %p294 = por %p292, %p293
      %p295 = scmp.ne.s32.totalorder %s287, %s290
      %p296 = scmp.eq.s32.totalorder %s22, 0
      %p297 = por %p295, %p296
      %p298 = scmp.ne.s32.totalorder %s287, %s290
      %p299 = scmp.eq.s32.totalorder %s27, 1
      %p300 = por %p298, %p299
      %p301 = scmp.ne.s32.totalorder %s290, %s291
      %p302 = scmp.eq.s32.totalorder %s27, 0
      %p303 = por %p301, %p302
      %p304 = scmp.ne.s32.totalorder %s290, %s291
      %p305 = scmp.eq.s32.totalorder %s28, 1
      %p306 = por %p304, %p305
      %p308 = scmp.ne.s32.totalorder %s291, %s307
      %p309 = scmp.eq.s32.totalorder %s28, 0
      %p310 = por %p308, %p309
      %s311 = ssub.s32 %s22, %s29
      %p312 = scmp.eq.s32.totalorder %s311, 0
      %s314 = sadd.s32 %s313, 1
      %s315 = scalar_select %p312, %s313, %s314
      %p318 = pneg %p312
      %p319 = scmp.eq.s32.totalorder %s22, 1
      %p320 = por %p318, %p319
      %p321 = scmp.ne.s32.totalorder %s313, %s316
      %p322 = scmp.eq.s32.totalorder %s22, 0
      %p323 = por %p321, %p322
      %p324 = scmp.ne.s32.totalorder %s313, %s316
      %p325 = scmp.eq.s32.totalorder %s27, 1
      %p326 = por %p324, %p325
      %p327 = scmp.ne.s32.totalorder %s316, %s317
      %p328 = scmp.eq.s32.totalorder %s27, 0
      %p329 = por %p327, %p328
      %p330 = scmp.ne.s32.totalorder %s316, %s317
      %p331 = scmp.eq.s32.totalorder %s28, 1
      %p332 = por %p330, %p331
      %p334 = scmp.ne.s32.totalorder %s317, %s333
      %p335 = scmp.eq.s32.totalorder %s28, 0
      %p336 = por %p334, %p335
      %s338 = sadd.s32 %s337, 1
      %p341 = scmp.eq.s32.totalorder %s22, 1
      %p342 = scmp.ne.s32.totalorder %s337, %s339
      %p343 = scmp.eq.s32.totalorder %s22, 0
      %p344 = por %p342, %p343
      %p345 = scmp.ne.s32.totalorder %s337, %s339
      %p346 = scmp.eq.s32.totalorder %s27, 1
      %p347 = por %p345, %p346
      %p348 = scmp.ne.s32.totalorder %s339, %s340
      %p349 = scmp.eq.s32.totalorder %s27, 0
      %p350 = por %p348, %p349
      %p351 = scmp.ne.s32.totalorder %s339, %s340
      %p352 = scmp.eq.s32.totalorder %s28, 1
      %p353 = por %p351, %p352
      %p355 = scmp.ne.s32.totalorder %s340, %s354
      %p356 = scmp.eq.s32.totalorder %s28, 0
      %p357 = por %p355, %p356
      %p358 = scmp.le.s32.totalorder 1, %s22
      %p359 = scmp.lt.s32.totalorder %s22, 3
      %p360 = pnand %p358, %p359
      %p361 = pneg %p360
      // Predicated region
      $region9: #{tpu_custom_call.1} parent=5 // pred_check
        _
      $region10: #{tpu_custom_call.1} parent=5 // pred_check_branch
        %363 = sbr.rel (%p360) target = $region12
      $region11: #{tpu_custom_call.1} parent=5 // pred_region
        %s364 = ssub.s32 %s22, 1
        // Predicated region
        $region13: #{tpu_custom_call.1} parent=11 // pred_check
          %p365 = pneg %p43
        $region14: #{tpu_custom_call.1} parent=11 // pred_check_branch
          %367 = sbr.rel (%p365) target = $region16
        $region15: #{tpu_custom_call.1} parent=11 // pred_region
          _
        $region16: #{tpu_custom_call.1} parent=11 // pred_fallthru
          _
      $region12: #{tpu_custom_call.1} parent=5 // pred_fallthru
        _
      %p368 = scmp.lt.s32.totalorder %s22, 2
      // Predicated region
      $region17: #{tpu_custom_call.1} parent=5 // pred_check
        %p369 = pneg %p368
      $region18: #{tpu_custom_call.1} parent=5 // pred_check_branch
        %371 = sbr.rel (%p369) target = $region20
      $region19: #{tpu_custom_call.1} parent=5 // pred_region
        // Predicated region
        $region21: #{tpu_custom_call.1} parent=19 // pred_check
          %p372 = pneg %p63
        $region22: #{tpu_custom_call.1} parent=19 // pred_check_branch
          %374 = sbr.rel (%p372) target = $region24
        $region23: #{tpu_custom_call.1} parent=19 // pred_region
          %p375 = scmp.lt.s32.totalorder %s22, 1
          %s376 = scalar_select %p375, %s22, 1
          %s377 = scalar_lea.vmem %s1, %s376
        $region24: #{tpu_custom_call.1} parent=19 // pred_fallthru
          _
        // Predicated region
        $region25: #{tpu_custom_call.1} parent=19 // pred_check
          %p378 = pneg %p89
        $region26: #{tpu_custom_call.1} parent=19 // pred_check_branch
          %380 = sbr.rel (%p378) target = $region28
        $region27: #{tpu_custom_call.1} parent=19 // pred_region
          %p381 = scmp.lt.s32.totalorder %s22, 1
          %s382 = scalar_select %p381, %s22, 1
          %s383 = scalar_lea.vmem %s2, %s382
        $region28: #{tpu_custom_call.1} parent=19 // pred_fallthru
          _
        // Predicated region
        $region29: #{tpu_custom_call.1} parent=19 // pred_check
          %p384 = pneg %p115
        $region30: #{tpu_custom_call.1} parent=19 // pred_check_branch
          %386 = sbr.rel (%p384) target = $region32
        $region31: #{tpu_custom_call.1} parent=19 // pred_region
          %p387 = scmp.lt.s32.totalorder %s22, 1
          %s388 = scalar_select %p387, %s22, 1
          %s389 = smul.addr %s388, 4
          %s390 = smul.addr %s389, 8
          %s391 = scalar_lea.vmem %s3, %s390
        $region32: #{tpu_custom_call.1} parent=19 // pred_fallthru
          _
        // Predicated region
        $region33: #{tpu_custom_call.1} parent=19 // pred_check
          %p392 = pneg %p141
        $region34: #{tpu_custom_call.1} parent=19 // pred_check_branch
          %394 = sbr.rel (%p392) target = $region36
        $region35: #{tpu_custom_call.1} parent=19 // pred_region
          %p395 = scmp.lt.s32.totalorder %s22, 1
          %s396 = scalar_select %p395, %s22, 1
          %s397 = smul.addr %s396, 4
          %s398 = smul.addr %s397, 8
          %s399 = scalar_lea.vmem %s4, %s398
        $region36: #{tpu_custom_call.1} parent=19 // pred_fallthru
          _
        // Predicated region
        $region37: #{tpu_custom_call.1} parent=19 // pred_check
          %p400 = pneg %p167
        $region38: #{tpu_custom_call.1} parent=19 // pred_check_branch
          %402 = sbr.rel (%p400) target = $region40
        $region39: #{tpu_custom_call.1} parent=19 // pred_region
          %p403 = scmp.lt.s32.totalorder %s22, 1
          %s404 = scalar_select %p403, %s22, 1
          %s405 = scalar_lea.vmem %s5, %s404
        $region40: #{tpu_custom_call.1} parent=19 // pred_fallthru
          _
        // Predicated region
        $region41: #{tpu_custom_call.1} parent=19 // pred_check
          %p406 = pneg %p193
        $region42: #{tpu_custom_call.1} parent=19 // pred_check_branch
          %408 = sbr.rel (%p406) target = $region44
        $region43: #{tpu_custom_call.1} parent=19 // pred_region
          %p409 = scmp.lt.s32.totalorder %s22, 1
          %s410 = scalar_select %p409, %s22, 1
          %s411 = scalar_lea.vmem %s6, %s410
        $region44: #{tpu_custom_call.1} parent=19 // pred_fallthru
          _
        // Predicated region
        $region45: #{tpu_custom_call.1} parent=19 // pred_check
          %p412 = pneg %p219
        $region46: #{tpu_custom_call.1} parent=19 // pred_check_branch
          %414 = sbr.rel (%p412) target = $region48
        $region47: #{tpu_custom_call.1} parent=19 // pred_region
          %p415 = scmp.lt.s32.totalorder %s22, 1
          %s416 = scalar_select %p415, %s22, 1
          %s417 = scalar_lea.vmem %s7, %s416
        $region48: #{tpu_custom_call.1} parent=19 // pred_fallthru
          _
        // Predicated region
        $region49: #{tpu_custom_call.1} parent=19 // pred_check
          %p418 = pneg %p245
        $region50: #{tpu_custom_call.1} parent=19 // pred_check_branch
          %420 = sbr.rel (%p418) target = $region52
        $region51: #{tpu_custom_call.1} parent=19 // pred_region
          %s421 = sand.u32 %s235, 1
          %s422 = scalar_lea.sflag [#allocation3], %s421
          %s423 = sand.u32 %s235, 1
          %s424 = smul.addr %s423, 32
          %s425 = scalar_lea.vmem [#allocation2], %s424
          %427 = vsyncadd %s422, 0
          %s428 = smul.addr %s22, 4
          %s429 = smul.addr %s428, 8
          %s430 = scalar_lea.hbm %s8, %s429
          %s431 = sshll.u32 %s430, 4
          %s432 = int_to_ptr.hbm [resolvable:$true] %s431
          %s433 = sshll.u32 %s425, 4
          %s434 = int_to_ptr.vmem [resolvable:$true] %s433
          %439 = dma.hbm_to_vmem [thread:$0]  %s432, 512, %s434, %s422, 128, 128, 8
        $region52: #{tpu_custom_call.1} parent=19 // pred_fallthru
          _
        // Predicated region
        $region53: #{tpu_custom_call.1} parent=19 // pred_check
          %p440 = pneg %p271
        $region54: #{tpu_custom_call.1} parent=19 // pred_check_branch
          %442 = sbr.rel (%p440) target = $region56
        $region55: #{tpu_custom_call.1} parent=19 // pred_region
          %p443 = scmp.lt.s32.totalorder %s22, 1
          %s444 = scalar_select %p443, %s22, 1
          %s445 = scalar_lea.vmem %s9, %s444
        $region56: #{tpu_custom_call.1} parent=19 // pred_fallthru
          _
        // Predicated region
        $region57: #{tpu_custom_call.1} parent=19 // pred_check
          %p446 = pneg %p297
        $region58: #{tpu_custom_call.1} parent=19 // pred_check_branch
          %448 = sbr.rel (%p446) target = $region60
        $region59: #{tpu_custom_call.1} parent=19 // pred_region
          %p449 = scmp.lt.s32.totalorder %s22, 1
          %s450 = scalar_select %p449, %s22, 1
          %s451 = smul.addr %s450, 6
          %s452 = smul.addr %s451, 8
          %s453 = scalar_lea.vmem %s10, %s452
        $region60: #{tpu_custom_call.1} parent=19 // pred_fallthru
          _
        // Predicated region
        $region61: #{tpu_custom_call.1} parent=19 // pred_check
          %p454 = pneg %p323
        $region62: #{tpu_custom_call.1} parent=19 // pred_check_branch
          %456 = sbr.rel (%p454) target = $region64
        $region63: #{tpu_custom_call.1} parent=19 // pred_region
          %p457 = scmp.lt.s32.totalorder %s22, 1
          %s458 = scalar_select %p457, %s22, 1
          %s459 = scalar_lea.vmem %s11, %s458
        $region64: #{tpu_custom_call.1} parent=19 // pred_fallthru
          _
      $region20: #{tpu_custom_call.1} parent=5 // pred_fallthru
        _
      %p460 = scmp.le.s32.totalorder 1, %s22
      %p461 = scmp.lt.s32.totalorder %s22, 3
      %p462 = pnand %p460, %p461
      %p463 = pneg %p462
      // Predicated region
      $region65: #{tpu_custom_call.1} parent=5 // pred_check
        _
      $region66: #{tpu_custom_call.1} parent=5 // pred_check_branch
        %465 = sbr.rel (%p462) target = $region68
      $region67: #{tpu_custom_call.1} parent=5 // pred_region
        %s466 = ssub.s32 %s22, 1
        %s467 = sand.u32 %s238, 1
        %s468 = scalar_lea.sflag [#allocation3], %s467
        %s469 = sand.u32 %s238, 1
        %s470 = smul.addr %s469, 32
        %s471 = scalar_lea.vmem [#allocation2], %s470
        // Predicated region
        $region69: #{tpu_custom_call.1} parent=67 // pred_check
          %p472 = pneg %p251
        $region70: #{tpu_custom_call.1} parent=67 // pred_check_branch
          %474 = sbr.rel (%p472) target = $region72
        $region71: #{tpu_custom_call.1} parent=67 // pred_region
          %476 = dma.done %s468, 512
        $region72: #{tpu_custom_call.1} parent=67 // pred_fallthru
          _
        %p477 = pneg %p43
        %p478 = pneg %p40
        %p479 = scmp.lt.s32.totalorder %s27, 1
        %s480 = scalar_select %p479, %s27, 1
        %s481 = scalar_lea.vmem %s1, %s480
        %p482 = pneg %p69
        %p483 = pneg %p66
        %p484 = scmp.lt.s32.totalorder %s27, 1
        %s485 = scalar_select %p484, %s27, 1
        %s486 = scalar_lea.vmem %s2, %s485
        %p487 = pneg %p95
        %p488 = pneg %p92
        %p489 = scmp.lt.s32.totalorder %s27, 1
        %s490 = scalar_select %p489, %s27, 1
        %s491 = smul.addr %s490, 4
        %s492 = smul.addr %s491, 8
        %s493 = scalar_lea.vmem %s3, %s492
        %p494 = pneg %p121
        %p495 = pneg %p118
        %p496 = scmp.lt.s32.totalorder %s27, 1
        %s497 = scalar_select %p496, %s27, 1
        %s498 = smul.addr %s497, 4
        %s499 = smul.addr %s498, 8
        %s500 = scalar_lea.vmem %s4, %s499
        %p501 = pneg %p147
        %p502 = pneg %p144
        %p503 = scmp.lt.s32.totalorder %s27, 1
        %s504 = scalar_select %p503, %s27, 1
        %s505 = scalar_lea.vmem %s5, %s504
        %p506 = pneg %p173
        %p507 = pneg %p170
        %p508 = scmp.lt.s32.totalorder %s27, 1
        %s509 = scalar_select %p508, %s27, 1
        %s510 = scalar_lea.vmem %s6, %s509
        %p511 = pneg %p199
        %p512 = pneg %p196
        %p513 = scmp.lt.s32.totalorder %s27, 1
        %s514 = scalar_select %p513, %s27, 1
        %s515 = scalar_lea.vmem %s7, %s514
        %p516 = pneg %p225
        %p517 = pneg %p222
        %s518 = sand.u32 %s238, 1
        %s519 = scalar_lea.sflag [#allocation3], %s518
        %s520 = sand.u32 %s238, 1
        %s521 = smul.addr %s520, 32
        %s522 = scalar_lea.vmem [#allocation2], %s521
        %p523 = pneg %p251
        %p524 = pneg %p248
        %p525 = scmp.lt.s32.totalorder %s27, 1
        %s526 = scalar_select %p525, %s27, 1
        %s527 = scalar_lea.vmem %s9, %s526
        %p528 = pneg %p277
        %p529 = pneg %p274
        %p530 = scmp.lt.s32.totalorder %s27, 1
        %s531 = scalar_select %p530, %s27, 1
        %s532 = smul.addr %s531, 6
        %s533 = smul.addr %s532, 8
        %s534 = scalar_lea.vmem %s10, %s533
        %p535 = pneg %p303
        %p536 = pneg %p300
        %p537 = scmp.lt.s32.totalorder %s27, 1
        %s538 = scalar_select %p537, %s27, 1
        %s539 = scalar_lea.vmem %s11, %s538
        %p540 = pneg %p329
        %p541 = pneg %p326
        %p542 = pneg %p350
        %p543 = pneg %p347
        %p544 = scmp.lt.s32.totalorder %s27, 1
        %s545 = scalar_select %p544, %s27, 1
        %s546 = scalar_lea.vmem %s1, %s545
        %p547 = scmp.lt.s32.totalorder %s27, 1
        %s548 = scalar_select %p547, %s27, 1
        %s549 = scalar_lea.vmem %s2, %s548
        %p550 = scmp.lt.s32.totalorder %s27, 1
        %s551 = scalar_select %p550, %s27, 1
        %s552 = smul.addr %s551, 4
        %s553 = smul.addr %s552, 8
        %s554 = scalar_lea.vmem %s3, %s553
        %p555 = scmp.lt.s32.totalorder %s27, 1
        %s556 = scalar_select %p555, %s27, 1
        %s557 = smul.addr %s556, 4
        %s558 = smul.addr %s557, 8
        %s559 = scalar_lea.vmem %s4, %s558
        %p560 = scmp.lt.s32.totalorder %s27, 1
        %s561 = scalar_select %p560, %s27, 1
        %s562 = scalar_lea.vmem %s5, %s561
        %p563 = scmp.lt.s32.totalorder %s27, 1
        %s564 = scalar_select %p563, %s27, 1
        %s565 = scalar_lea.vmem %s6, %s564
        %p566 = scmp.lt.s32.totalorder %s27, 1
        %s567 = scalar_select %p566, %s27, 1
        %s568 = scalar_lea.vmem %s7, %s567
        %p569 = scmp.lt.s32.totalorder %s27, 1
        %s570 = scalar_select %p569, %s27, 1
        %s571 = scalar_lea.vmem %s9, %s570
        %p572 = scmp.lt.s32.totalorder %s27, 1
        %s573 = scalar_select %p572, %s27, 1
        %s574 = smul.addr %s573, 6
        %s575 = smul.addr %s574, 8
        %s576 = scalar_lea.vmem %s10, %s575
        %p577 = scmp.lt.s32.totalorder %s27, 1
        %s578 = scalar_select %p577, %s27, 1
        %s579 = scalar_lea.vmem %s11, %s578
        %p580 = scmp.eq.s32.totalorder %s27, 0
        // Predicated region
        $region73: #{tpu_custom_call.1} parent=67 // pred_check
          %p581 = pneg %p580
        $region74: #{tpu_custom_call.1} parent=67 // pred_check_branch
          %583 = sbr.rel (%p581) target = $region76
        $region75: #{tpu_custom_call.1} parent=67 // pred_region
          %v584 = vld [vmem:[%s0] sm:$0xff]
          %v585 = vld [vmem:[%s0 + $0x8] sm:$0xff]
          %vm586 = vcmask 261120
          %587 = vst.msk [vmem:[#allocation5] sm:$0xff] %vm586, %v584
          %588 = vst.msk [vmem:[#allocation5 + $0x8] sm:$0xff] %vm586, %v585
        $region76: #{tpu_custom_call.1} parent=67 // pred_fallthru
          _
        %v589 = vld [vmem:[#allocation5] sm:$0xff]
        %v590 = vld [vmem:[#allocation5 + $0x8] sm:$0xff]
        %v591 = vld [vmem:[%s546] sm:$0x1]
        %v592 = vld [vmem:[%s549] sm:$0x1]
        %vm593 = vcmask 261120
        %v594 = vsel %vm593, %v589, 0.0
        %595 = vadd.xlane.f32.xlu0 %v594
        %v596 = vpop.xlane.xlu0 %595
        %v597 = vsel %vm593, %v590, 0.0
        %598 = vadd.xlane.f32.xlu0 %v597
        %v599 = vpop.xlane.xlu0 %598
        %v600 = vrcp.pop 32.0
        %v601 = vmul.f32 32.0, %v600
        %v602 = vsub.f32 1.0, %v601
        %v603 = vmul.f32 %v600, %v602
        %v604 = vadd.f32 %v600, %v603
        %vm605 = vweird.f32 %v600
        %v606 = vsel %vm605, %v600, %v604
        %v607 = vmul.f32 %v596, %v606
        %v608 = vmul.f32 %v599, %v606
        %v609 = vsub.f32 %v589, %v607
        %v610 = vsub.f32 %v590, %v608
        %v611 = vmul.f32 %v609, %v609
        %v612 = vmul.f32 %v610, %v610
        %v613 = vsel %vm593, %v611, 0.0
        %614 = vadd.xlane.f32.xlu0 %v613
        %v615 = vpop.xlane.xlu0 %614
        %v616 = vsel %vm593, %v612, 0.0
        %617 = vadd.xlane.f32.xlu0 %v616
        %v618 = vpop.xlane.xlu0 %617
        %v619 = vmul.f32 %v615, %v606
        %v620 = vmul.f32 %v618, %v606
        %v621 = vadd.f32 %v619, 1e-05
        %v622 = vadd.f32 %v620, 1e-05
        %v623 = vrsqrt.pop %v621
        %v624 = vmul.f32 %v623, %v621
        %v625 = vmul.f32 %v624, %v623
        %v626 = vmul.f32 0.5, %v625
        %v627 = vsub.f32 1.5, %v626
        %v628 = vmul.f32 %v623, %v627
        %vm629 = vweird.f32 %v621
        %vm630 = vweird.f32 %v623
        %vm631 = vmor %vm629, %vm630
        %v632 = vsel %vm631, %v623, %v628
        %v633 = vrsqrt.pop %v622
        %v634 = vmul.f32 %v633, %v622
        %v635 = vmul.f32 %v634, %v633
        %v636 = vmul.f32 0.5, %v635
        %v637 = vsub.f32 1.5, %v636
        %v638 = vmul.f32 %v633, %v637
        %vm639 = vweird.f32 %v622
        %vm640 = vweird.f32 %v633
        %vm641 = vmor %vm639, %vm640
        %v642 = vsel %vm641, %v633, %v638
        %v643 = vmul.f32 %v609, %v632
        %v644 = vmul.f32 %v610, %v642
        %v646 = vperm.slane %v591, 0
        %v648 = vmul.f32 %v643, %v646
        %v649 = vmul.f32 %v644, %v646
        %v651 = vperm.slane %v592, 0
        %v653 = vadd.f32 %v648, %v651
        %v654 = vadd.f32 %v649, %v651
        %v655 = vld [vmem:[%s554] sm:$0xff]
        %v656 = vld [vmem:[%s554 + $0x8] sm:$0xff]
        %v657 = vld [vmem:[%s554 + $0x10] sm:$0xff]
        %v658 = vld [vmem:[%s554 + $0x18] sm:$0xff]
        %v660 = vsel %vm593, %v653, 0
        %v663 = vsel %vm593, %v654, 0
        %665 = vmatpush.msra.mxu0 0.0
        %666 = vmatpush.msra.mxu0 0.0
        %667 = vmatpush.msra.mxu0 0.0
        %668 = vmatpush.msra.mxu0 0.0
        %669 = vmatpush.msra.mxu0 0.0
        %670 = vmatpush.msra.mxu0 0.0
        %671 = vmatpush.msra.mxu0 0.0
        %672 = vmatpush.msra.mxu0 0.0
        %673 = vmatpush.msra.mxu0 0.0
        %674 = vmatpush.msra.mxu0 0.0
        %675 = vmatpush.msra.mxu0 0.0
        %676 = vmatpush.msra.mxu0 0.0
        %677 = vmatpush.msra.mxu0 %v658
        %678 = vmatpush.msra.mxu0 %v657
        %679 = vmatpush.msra.mxu0 %v656
        %680 = vmatpush.msra.mxu0 %v655
        %681 = vmatmul.f32.gmra.mxu0 %v660
        %v682 = vpop.f32.mrf.mxu0
        %v683 = vadd.f32 0.0, %v682
        %684 = vmatmul.f32.gmra.mxu0 %v663
        %v685 = vpop.f32.mrf.mxu0
        %v686 = vadd.f32 0.0, %v685
        %687 = vdwg.mxu0
        %689 = vrot.lane.b32.xlu0 %v683, 96
        %v690 = vpop.permute.xlu0 %689
        %vm691 = vcmask 64512
        %v692 = vsel %vm691, %v683, 0
        %v694 = vsel %vm691, %v690, 0
        %696 = vmatpush.xpose.msra.mxu0 0.0
        %697 = vmatpush.xpose.msra.mxu0 0.0
        %698 = vmatpush.xpose.msra.mxu0 0.0
        %699 = vmatpush.xpose.msra.mxu0 0.0
        %700 = vmatpush.xpose.msra.mxu0 0.0
        %701 = vmatpush.xpose.msra.mxu0 0.0
        %702 = vmatpush.xpose.msra.mxu0 0.0
        %703 = vmatpush.xpose.msra.mxu0 0.0
        %704 = vmatpush.xpose.msra.mxu0 0.0
        %705 = vmatpush.xpose.msra.mxu0 0.0
        %706 = vmatpush.xpose.msra.mxu0 0.0
        %707 = vmatpush.xpose.msra.mxu0 0.0
        %708 = vmatpush.xpose.msra.mxu0 0.0
        %709 = vmatpush.xpose.msra.mxu0 0.0
        %710 = vmatpush.xpose.msra.mxu0 0.0
        %711 = vmatpush.xpose.msra.mxu0 %v694
        %712 = vmatmul.f32.gmra.mxu0 %v692
        %v713 = vpop.f32.mrf.mxu0
        %v714 = vadd.f32 0.0, %v713
        %715 = vdwg.mxu0
        %v716 = vsel %vm691, %v714, -inf
        %717 = vmax.xlane.f32.xlu0 %v716
        %v718 = vpop.xlane.xlu0 %717
        %v719 = vsub.f32 %v714, %v718
        %v720 = vmul.f32 %v719, 1.442695
        %v721 = vpow.pop %v720
        %v722 = vsel %vm691, %v721, 0.0
        %723 = vadd.xlane.f32.xlu0 %v722
        %v724 = vpop.xlane.xlu0 %723
        %v725 = vrcp.pop %v724
        %v726 = vmul.f32 %v724, %v725
        %v727 = vsub.f32 1.0, %v726
        %v728 = vmul.f32 %v725, %v727
        %v729 = vadd.f32 %v725, %v728
        %vm730 = vweird.f32 %v724
        %vm731 = vweird.f32 %v725
        %vm732 = vmor %vm730, %vm731
        %v733 = vsel %vm732, %v725, %v729
        %v734 = vand.u32 2147483647, %v724
        %vm735 = vcmp.eq.f32.partialorder %v734, 8.507059e+37
        %v736 = vand.u32 %v724, 2147483648
        %v737 = vor.u32 1.1754944e-38, %v736
        %v738 = vsel %vm735, %v737, %v733
        %v739 = vmul.f32 %v721, %v738
        %740 = vrot.lane.b32.xlu0 %v683, 64
        %v741 = vpop.permute.xlu0 %740
        %v744 = vsel %vm691, %v739, 0
        %746 = vmatpush.msra.mxu0 0.0
        %747 = vmatpush.msra.mxu0 0.0
        %748 = vmatpush.msra.mxu0 0.0
        %749 = vmatpush.msra.mxu0 0.0
        %750 = vmatpush.msra.mxu0 0.0
        %751 = vmatpush.msra.mxu0 0.0
        %752 = vmatpush.msra.mxu0 0.0
        %753 = vmatpush.msra.mxu0 0.0
        %754 = vmatpush.msra.mxu0 0.0
        %755 = vmatpush.msra.mxu0 0.0
        %756 = vmatpush.msra.mxu0 0.0
        %757 = vmatpush.msra.mxu0 0.0
        %758 = vmatpush.msra.mxu0 0.0
        %759 = vmatpush.msra.mxu0 0.0
        %760 = vmatpush.msra.mxu0 0.0
        %761 = vmatpush.msra.mxu0 %v741
        %762 = vmatmul.f32.gmra.mxu0 %v744
        %v763 = vpop.f32.mrf.mxu0
        %v764 = vadd.f32 0.0, %v763
        %765 = vdwg.mxu0
        %766 = vrot.lane.b32.xlu0 %v683, 120
        %v767 = vpop.permute.xlu0 %766
        %768 = vrot.lane.b32.xlu0 %v683, 88
        %v769 = vpop.permute.xlu0 %768
        %v770 = vsel %vm691, %v767, 0
        %v772 = vsel %vm691, %v769, 0
        %774 = vmatpush.xpose.msra.mxu0 0.0
        %775 = vmatpush.xpose.msra.mxu0 0.0
        %776 = vmatpush.xpose.msra.mxu0 0.0
        %777 = vmatpush.xpose.msra.mxu0 0.0
        %778 = vmatpush.xpose.msra.mxu0 0.0
        %779 = vmatpush.xpose.msra.mxu0 0.0
        %780 = vmatpush.xpose.msra.mxu0 0.0
        %781 = vmatpush.xpose.msra.mxu0 0.0
        %782 = vmatpush.xpose.msra.mxu0 0.0
        %783 = vmatpush.xpose.msra.mxu0 0.0
        %784 = vmatpush.xpose.msra.mxu0 0.0
        %785 = vmatpush.xpose.msra.mxu0 0.0
        %786 = vmatpush.xpose.msra.mxu0 0.0
        %787 = vmatpush.xpose.msra.mxu0 0.0
        %788 = vmatpush.xpose.msra.mxu0 0.0
        %789 = vmatpush.xpose.msra.mxu0 %v772
        %790 = vmatmul.f32.gmra.mxu0 %v770
        %v791 = vpop.f32.mrf.mxu0
        %v792 = vadd.f32 0.0, %v791
        %793 = vdwg.mxu0
        %v794 = vsel %vm691, %v792, -inf
        %795 = vmax.xlane.f32.xlu0 %v794
        %v796 = vpop.xlane.xlu0 %795
        %v797 = vsub.f32 %v792, %v796
        %v798 = vmul.f32 %v797, 1.442695
        %v799 = vpow.pop %v798
        %v800 = vsel %vm691, %v799, 0.0
        %801 = vadd.xlane.f32.xlu0 %v800
        %v802 = vpop.xlane.xlu0 %801
        %v803 = vrcp.pop %v802
        %v804 = vmul.f32 %v802, %v803
        %v805 = vsub.f32 1.0, %v804
        %v806 = vmul.f32 %v803, %v805
        %v807 = vadd.f32 %v803, %v806
        %vm808 = vweird.f32 %v802
        %vm809 = vweird.f32 %v803
        %vm810 = vmor %vm808, %vm809
        %v811 = vsel %vm810, %v803, %v807
        %v812 = vand.u32 2147483647, %v802
        %vm813 = vcmp.eq.f32.partialorder %v812, 8.507059e+37
        %v814 = vand.u32 %v802, 2147483648
        %v815 = vor.u32 1.1754944e-38, %v814
        %v816 = vsel %vm813, %v815, %v811
        %v817 = vmul.f32 %v799, %v816
        %818 = vrot.lane.b32.xlu0 %v683, 56
        %v819 = vpop.permute.xlu0 %818
        %v822 = vsel %vm691, %v817, 0
        %824 = vmatpush.msra.mxu0 0.0
        %825 = vmatpush.msra.mxu0 0.0
        %826 = vmatpush.msra.mxu0 0.0
        %827 = vmatpush.msra.mxu0 0.0
        %828 = vmatpush.msra.mxu0 0.0
        %829 = vmatpush.msra.mxu0 0.0
        %830 = vmatpush.msra.mxu0 0.0
        %831 = vmatpush.msra.mxu0 0.0
        %832 = vmatpush.msra.mxu0 0.0
        %833 = vmatpush.msra.mxu0 0.0
        %834 = vmatpush.msra.mxu0 0.0
        %835 = vmatpush.msra.mxu0 0.0
        %836 = vmatpush.msra.mxu0 0.0
        %837 = vmatpush.msra.mxu0 0.0
        %838 = vmatpush.msra.mxu0 0.0
        %839 = vmatpush.msra.mxu0 %v819
        %840 = vmatmul.f32.gmra.mxu0 %v822
        %v841 = vpop.f32.mrf.mxu0
        %v842 = vadd.f32 0.0, %v841
        %843 = vdwg.mxu0
        %844 = vrot.lane.b32.xlu0 %v683, 112
        %v845 = vpop.permute.xlu0 %844
        %846 = vrot.lane.b32.xlu0 %v683, 80
        %v847 = vpop.permute.xlu0 %846
        %v848 = vsel %vm691, %v845, 0
        %v850 = vsel %vm691, %v847, 0
        %852 = vmatpush.xpose.msra.mxu0 0.0
        %853 = vmatpush.xpose.msra.mxu0 0.0
        %854 = vmatpush.xpose.msra.mxu0 0.0
        %855 = vmatpush.xpose.msra.mxu0 0.0
        %856 = vmatpush.xpose.msra.mxu0 0.0
        %857 = vmatpush.xpose.msra.mxu0 0.0
        %858 = vmatpush.xpose.msra.mxu0 0.0
        %859 = vmatpush.xpose.msra.mxu0 0.0
        %860 = vmatpush.xpose.msra.mxu0 0.0
        %861 = vmatpush.xpose.msra.mxu0 0.0
        %862 = vmatpush.xpose.msra.mxu0 0.0
        %863 = vmatpush.xpose.msra.mxu0 0.0
        %864 = vmatpush.xpose.msra.mxu0 0.0
        %865 = vmatpush.xpose.msra.mxu0 0.0
        %866 = vmatpush.xpose.msra.mxu0 0.0
        %867 = vmatpush.xpose.msra.mxu0 %v850
        %868 = vmatmul.f32.gmra.mxu0 %v848
        %v869 = vpop.f32.mrf.mxu0
        %v870 = vadd.f32 0.0, %v869
        %871 = vdwg.mxu0
        %v872 = vsel %vm691, %v870, -inf
        %873 = vmax.xlane.f32.xlu0 %v872
        %v874 = vpop.xlane.xlu0 %873
        %v875 = vsub.f32 %v870, %v874
        %v876 = vmul.f32 %v875, 1.442695
        %v877 = vpow.pop %v876
        %v878 = vsel %vm691, %v877, 0.0
        %879 = vadd.xlane.f32.xlu0 %v878
        %v880 = vpop.xlane.xlu0 %879
        %v881 = vrcp.pop %v880
        %v882 = vmul.f32 %v880, %v881
        %v883 = vsub.f32 1.0, %v882
        %v884 = vmul.f32 %v881, %v883
        %v885 = vadd.f32 %v881, %v884
        %vm886 = vweird.f32 %v880
        %vm887 = vweird.f32 %v881
        %vm888 = vmor %vm886, %vm887
        %v889 = vsel %vm888, %v881, %v885
        %v890 = vand.u32 2147483647, %v880
        %vm891 = vcmp.eq.f32.partialorder %v890, 8.507059e+37
        %v892 = vand.u32 %v880, 2147483648
        %v893 = vor.u32 1.1754944e-38, %v892
        %v894 = vsel %vm891, %v893, %v889
        %v895 = vmul.f32 %v877, %v894
        %896 = vrot.lane.b32.xlu0 %v683, 48
        %v897 = vpop.permute.xlu0 %896
        %v900 = vsel %vm691, %v895, 0
        %902 = vmatpush.msra.mxu0 0.0
        %903 = vmatpush.msra.mxu0 0.0
        %904 = vmatpush.msra.mxu0 0.0
        %905 = vmatpush.msra.mxu0 0.0
        %906 = vmatpush.msra.mxu0 0.0
        %907 = vmatpush.msra.mxu0 0.0
        %908 = vmatpush.msra.mxu0 0.0
        %909 = vmatpush.msra.mxu0 0.0
        %910 = vmatpush.msra.mxu0 0.0
        %911 = vmatpush.msra.mxu0 0.0
        %912 = vmatpush.msra.mxu0 0.0
        %913 = vmatpush.msra.mxu0 0.0
        %914 = vmatpush.msra.mxu0 0.0
        %915 = vmatpush.msra.mxu0 0.0
        %916 = vmatpush.msra.mxu0 0.0
        %917 = vmatpush.msra.mxu0 %v897
        %918 = vmatmul.f32.gmra.mxu0 %v900
        %v919 = vpop.f32.mrf.mxu0
        %v920 = vadd.f32 0.0, %v919
        %921 = vdwg.mxu0
        %922 = vrot.lane.b32.xlu0 %v683, 104
        %v923 = vpop.permute.xlu0 %922
        %924 = vrot.lane.b32.xlu0 %v683, 72
        %v925 = vpop.permute.xlu0 %924
        %v926 = vsel %vm691, %v923, 0
        %v928 = vsel %vm691, %v925, 0
        %930 = vmatpush.xpose.msra.mxu0 0.0
        %931 = vmatpush.xpose.msra.mxu0 0.0
        %932 = vmatpush.xpose.msra.mxu0 0.0
        %933 = vmatpush.xpose.msra.mxu0 0.0
        %934 = vmatpush.xpose.msra.mxu0 0.0
        %935 = vmatpush.xpose.msra.mxu0 0.0
        %936 = vmatpush.xpose.msra.mxu0 0.0
        %937 = vmatpush.xpose.msra.mxu0 0.0
        %938 = vmatpush.xpose.msra.mxu0 0.0
        %939 = vmatpush.xpose.msra.mxu0 0.0
        %940 = vmatpush.xpose.msra.mxu0 0.0
        %941 = vmatpush.xpose.msra.mxu0 0.0
        %942 = vmatpush.xpose.msra.mxu0 0.0
        %943 = vmatpush.xpose.msra.mxu0 0.0
        %944 = vmatpush.xpose.msra.mxu0 0.0
        %945 = vmatpush.xpose.msra.mxu0 %v928
        %946 = vmatmul.f32.gmra.mxu0 %v926
        %v947 = vpop.f32.mrf.mxu0
        %v948 = vadd.f32 0.0, %v947
        %949 = vdwg.mxu0
        %v950 = vsel %vm691, %v948, -inf
        %951 = vmax.xlane.f32.xlu0 %v950
        %v952 = vpop.xlane.xlu0 %951
        %v953 = vsub.f32 %v948, %v952
        %v954 = vmul.f32 %v953, 1.442695
        %v955 = vpow.pop %v954
        %v956 = vsel %vm691, %v955, 0.0
        %957 = vadd.xlane.f32.xlu0 %v956
        %v958 = vpop.xlane.xlu0 %957
        %v959 = vrcp.pop %v958
        %v960 = vmul.f32 %v958, %v959
        %v961 = vsub.f32 1.0, %v960
        %v962 = vmul.f32 %v959, %v961
        %v963 = vadd.f32 %v959, %v962
        %vm964 = vweird.f32 %v958
        %vm965 = vweird.f32 %v959
        %vm966 = vmor %vm964, %vm965
        %v967 = vsel %vm966, %v959, %v963
        %v968 = vand.u32 2147483647, %v958
        %vm969 = vcmp.eq.f32.partialorder %v968, 8.507059e+37
        %v970 = vand.u32 %v958, 2147483648
        %v971 = vor.u32 1.1754944e-38, %v970
        %v972 = vsel %vm969, %v971, %v967
        %v973 = vmul.f32 %v955, %v972
        %974 = vrot.lane.b32.xlu0 %v683, 40
        %v975 = vpop.permute.xlu0 %974
        %v978 = vsel %vm691, %v973, 0
        %980 = vmatpush.msra.mxu0 0.0
        %981 = vmatpush.msra.mxu0 0.0
        %982 = vmatpush.msra.mxu0 0.0
        %983 = vmatpush.msra.mxu0 0.0
        %984 = vmatpush.msra.mxu0 0.0
        %985 = vmatpush.msra.mxu0 0.0
        %986 = vmatpush.msra.mxu0 0.0
        %987 = vmatpush.msra.mxu0 0.0
        %988 = vmatpush.msra.mxu0 0.0
        %989 = vmatpush.msra.mxu0 0.0
        %990 = vmatpush.msra.mxu0 0.0
        %991 = vmatpush.msra.mxu0 0.0
        %992 = vmatpush.msra.mxu0 0.0
        %993 = vmatpush.msra.mxu0 0.0
        %994 = vmatpush.msra.mxu0 0.0
        %995 = vmatpush.msra.mxu0 %v975
        %996 = vmatmul.f32.gmra.mxu0 %v978
        %v997 = vpop.f32.mrf.mxu0
        %v998 = vadd.f32 0.0, %v997
        %999 = vdwg.mxu0
        %1001 = vrot.lane.b32.xlu0 %v842, 8
        %v1002 = vpop.permute.xlu0 %1001
        %1005 = vrot.lane.b32.xlu0 %v920, 16
        %v1006 = vpop.permute.xlu0 %1005
        %1009 = vrot.lane.b32.xlu0 %v998, 24
        %v1010 = vpop.permute.xlu0 %1009
        %v1012 = vsel %vm691, %v764, %v1002
        %vm1013 = vcmask 130048
        %v1014 = vsel %vm1013, %v1012, %v1006
        %vm1015 = vcmask 195584
        %v1016 = vsel %vm1015, %v1014, %v1010
        %1018 = vrot.lane.b32.xlu0 %v686, 96
        %v1019 = vpop.permute.xlu0 %1018
        %v1020 = vsel %vm691, %v686, 0
        %v1022 = vsel %vm691, %v1019, 0
        %1024 = vmatpush.xpose.msra.mxu0 0.0
        %1025 = vmatpush.xpose.msra.mxu0 0.0
        %1026 = vmatpush.xpose.msra.mxu0 0.0
        %1027 = vmatpush.xpose.msra.mxu0 0.0
        %1028 = vmatpush.xpose.msra.mxu0 0.0
        %1029 = vmatpush.xpose.msra.mxu0 0.0
        %1030 = vmatpush.xpose.msra.mxu0 0.0
        %1031 = vmatpush.xpose.msra.mxu0 0.0
        %1032 = vmatpush.xpose.msra.mxu0 0.0
        %1033 = vmatpush.xpose.msra.mxu0 0.0
        %1034 = vmatpush.xpose.msra.mxu0 0.0
        %1035 = vmatpush.xpose.msra.mxu0 0.0
        %1036 = vmatpush.xpose.msra.mxu0 0.0
        %1037 = vmatpush.xpose.msra.mxu0 0.0
        %1038 = vmatpush.xpose.msra.mxu0 0.0
        %1039 = vmatpush.xpose.msra.mxu0 %v1022
        %1040 = vmatmul.f32.gmra.mxu0 %v1020
        %v1041 = vpop.f32.mrf.mxu0
        %v1042 = vadd.f32 0.0, %v1041
        %1043 = vdwg.mxu0
        %v1044 = vsel %vm691, %v1042, -inf
        %1045 = vmax.xlane.f32.xlu0 %v1044
        %v1046 = vpop.xlane.xlu0 %1045
        %v1047 = vsub.f32 %v1042, %v1046
        %v1048 = vmul.f32 %v1047, 1.442695
        %v1049 = vpow.pop %v1048
        %v1050 = vsel %vm691, %v1049, 0.0
        %1051 = vadd.xlane.f32.xlu0 %v1050
        %v1052 = vpop.xlane.xlu0 %1051
        %v1053 = vrcp.pop %v1052
        %v1054 = vmul.f32 %v1052, %v1053
        %v1055 = vsub.f32 1.0, %v1054
        %v1056 = vmul.f32 %v1053, %v1055
        %v1057 = vadd.f32 %v1053, %v1056
        %vm1058 = vweird.f32 %v1052
        %vm1059 = vweird.f32 %v1053
        %vm1060 = vmor %vm1058, %vm1059
        %v1061 = vsel %vm1060, %v1053, %v1057
        %v1062 = vand.u32 2147483647, %v1052
        %vm1063 = vcmp.eq.f32.partialorder %v1062, 8.507059e+37
        %v1064 = vand.u32 %v1052, 2147483648
        %v1065 = vor.u32 1.1754944e-38, %v1064
        %v1066 = vsel %vm1063, %v1065, %v1061
        %v1067 = vmul.f32 %v1049, %v1066
        %1068 = vrot.lane.b32.xlu0 %v686, 64
        %v1069 = vpop.permute.xlu0 %1068
        %v1072 = vsel %vm691, %v1067, 0
        %1074 = vmatpush.msra.mxu0 0.0
        %1075 = vmatpush.msra.mxu0 0.0
        %1076 = vmatpush.msra.mxu0 0.0
        %1077 = vmatpush.msra.mxu0 0.0
        %1078 = vmatpush.msra.mxu0 0.0
        %1079 = vmatpush.msra.mxu0 0.0
        %1080 = vmatpush.msra.mxu0 0.0
        %1081 = vmatpush.msra.mxu0 0.0
        %1082 = vmatpush.msra.mxu0 0.0
        %1083 = vmatpush.msra.mxu0 0.0
        %1084 = vmatpush.msra.mxu0 0.0
        %1085 = vmatpush.msra.mxu0 0.0
        %1086 = vmatpush.msra.mxu0 0.0
        %1087 = vmatpush.msra.mxu0 0.0
        %1088 = vmatpush.msra.mxu0 0.0
        %1089 = vmatpush.msra.mxu0 %v1069
        %1090 = vmatmul.f32.gmra.mxu0 %v1072
        %v1091 = vpop.f32.mrf.mxu0
        %v1092 = vadd.f32 0.0, %v1091
        %1093 = vdwg.mxu0
        %1094 = vrot.lane.b32.xlu0 %v686, 120
        %v1095 = vpop.permute.xlu0 %1094
        %1096 = vrot.lane.b32.xlu0 %v686, 88
        %v1097 = vpop.permute.xlu0 %1096
        %v1098 = vsel %vm691, %v1095, 0
        %v1100 = vsel %vm691, %v1097, 0
        %1102 = vmatpush.xpose.msra.mxu0 0.0
        %1103 = vmatpush.xpose.msra.mxu0 0.0
        %1104 = vmatpush.xpose.msra.mxu0 0.0
        %1105 = vmatpush.xpose.msra.mxu0 0.0
        %1106 = vmatpush.xpose.msra.mxu0 0.0
        %1107 = vmatpush.xpose.msra.mxu0 0.0
        %1108 = vmatpush.xpose.msra.mxu0 0.0
        %1109 = vmatpush.xpose.msra.mxu0 0.0
        %1110 = vmatpush.xpose.msra.mxu0 0.0
        %1111 = vmatpush.xpose.msra.mxu0 0.0
        %1112 = vmatpush.xpose.msra.mxu0 0.0
        %1113 = vmatpush.xpose.msra.mxu0 0.0
        %1114 = vmatpush.xpose.msra.mxu0 0.0
        %1115 = vmatpush.xpose.msra.mxu0 0.0
        %1116 = vmatpush.xpose.msra.mxu0 0.0
        %1117 = vmatpush.xpose.msra.mxu0 %v1100
        %1118 = vmatmul.f32.gmra.mxu0 %v1098
        %v1119 = vpop.f32.mrf.mxu0
        %v1120 = vadd.f32 0.0, %v1119
        %1121 = vdwg.mxu0
        %v1122 = vsel %vm691, %v1120, -inf
        %1123 = vmax.xlane.f32.xlu0 %v1122
        %v1124 = vpop.xlane.xlu0 %1123
        %v1125 = vsub.f32 %v1120, %v1124
        %v1126 = vmul.f32 %v1125, 1.442695
        %v1127 = vpow.pop %v1126
        %v1128 = vsel %vm691, %v1127, 0.0
        %1129 = vadd.xlane.f32.xlu0 %v1128
        %v1130 = vpop.xlane.xlu0 %1129
        %v1131 = vrcp.pop %v1130
        %v1132 = vmul.f32 %v1130, %v1131
        %v1133 = vsub.f32 1.0, %v1132
        %v1134 = vmul.f32 %v1131, %v1133
        %v1135 = vadd.f32 %v1131, %v1134
        %vm1136 = vweird.f32 %v1130
        %vm1137 = vweird.f32 %v1131
        %vm1138 = vmor %vm1136, %vm1137
        %v1139 = vsel %vm1138, %v1131, %v1135
        %v1140 = vand.u32 2147483647, %v1130
        %vm1141 = vcmp.eq.f32.partialorder %v1140, 8.507059e+37
        %v1142 = vand.u32 %v1130, 2147483648
        %v1143 = vor.u32 1.1754944e-38, %v1142
        %v1144 = vsel %vm1141, %v1143, %v1139
        %v1145 = vmul.f32 %v1127, %v1144
        %1146 = vrot.lane.b32.xlu0 %v686, 56
        %v1147 = vpop.permute.xlu0 %1146
        %v1150 = vsel %vm691, %v1145, 0
        %1152 = vmatpush.msra.mxu0 0.0
        %1153 = vmatpush.msra.mxu0 0.0
        %1154 = vmatpush.msra.mxu0 0.0
        %1155 = vmatpush.msra.mxu0 0.0
        %1156 = vmatpush.msra.mxu0 0.0
        %1157 = vmatpush.msra.mxu0 0.0
        %1158 = vmatpush.msra.mxu0 0.0
        %1159 = vmatpush.msra.mxu0 0.0
        %1160 = vmatpush.msra.mxu0 0.0
        %1161 = vmatpush.msra.mxu0 0.0
        %1162 = vmatpush.msra.mxu0 0.0
        %1163 = vmatpush.msra.mxu0 0.0
        %1164 = vmatpush.msra.mxu0 0.0
        %1165 = vmatpush.msra.mxu0 0.0
        %1166 = vmatpush.msra.mxu0 0.0
        %1167 = vmatpush.msra.mxu0 %v1147
        %1168 = vmatmul.f32.gmra.mxu0 %v1150
        %v1169 = vpop.f32.mrf.mxu0
        %v1170 = vadd.f32 0.0, %v1169
        %1171 = vdwg.mxu0
        %1172 = vrot.lane.b32.xlu0 %v686, 112
        %v1173 = vpop.permute.xlu0 %1172
        %1174 = vrot.lane.b32.xlu0 %v686, 80
        %v1175 = vpop.permute.xlu0 %1174
        %v1176 = vsel %vm691, %v1173, 0
        %v1178 = vsel %vm691, %v1175, 0
        %1180 = vmatpush.xpose.msra.mxu0 0.0
        %1181 = vmatpush.xpose.msra.mxu0 0.0
        %1182 = vmatpush.xpose.msra.mxu0 0.0
        %1183 = vmatpush.xpose.msra.mxu0 0.0
        %1184 = vmatpush.xpose.msra.mxu0 0.0
        %1185 = vmatpush.xpose.msra.mxu0 0.0
        %1186 = vmatpush.xpose.msra.mxu0 0.0
        %1187 = vmatpush.xpose.msra.mxu0 0.0
        %1188 = vmatpush.xpose.msra.mxu0 0.0
        %1189 = vmatpush.xpose.msra.mxu0 0.0
        %1190 = vmatpush.xpose.msra.mxu0 0.0
        %1191 = vmatpush.xpose.msra.mxu0 0.0
        %1192 = vmatpush.xpose.msra.mxu0 0.0
        %1193 = vmatpush.xpose.msra.mxu0 0.0
        %1194 = vmatpush.xpose.msra.mxu0 0.0
        %1195 = vmatpush.xpose.msra.mxu0 %v1178
        %1196 = vmatmul.f32.gmra.mxu0 %v1176
        %v1197 = vpop.f32.mrf.mxu0
        %v1198 = vadd.f32 0.0, %v1197
        %1199 = vdwg.mxu0
        %v1200 = vsel %vm691, %v1198, -inf
        %1201 = vmax.xlane.f32.xlu0 %v1200
        %v1202 = vpop.xlane.xlu0 %1201
        %v1203 = vsub.f32 %v1198, %v1202
        %v1204 = vmul.f32 %v1203, 1.442695
        %v1205 = vpow.pop %v1204
        %v1206 = vsel %vm691, %v1205, 0.0
        %1207 = vadd.xlane.f32.xlu0 %v1206
        %v1208 = vpop.xlane.xlu0 %1207
        %v1209 = vrcp.pop %v1208
        %v1210 = vmul.f32 %v1208, %v1209
        %v1211 = vsub.f32 1.0, %v1210
        %v1212 = vmul.f32 %v1209, %v1211
        %v1213 = vadd.f32 %v1209, %v1212
        %vm1214 = vweird.f32 %v1208
        %vm1215 = vweird.f32 %v1209
        %vm1216 = vmor %vm1214, %vm1215
        %v1217 = vsel %vm1216, %v1209, %v1213
        %v1218 = vand.u32 2147483647, %v1208
        %vm1219 = vcmp.eq.f32.partialorder %v1218, 8.507059e+37
        %v1220 = vand.u32 %v1208, 2147483648
        %v1221 = vor.u32 1.1754944e-38, %v1220
        %v1222 = vsel %vm1219, %v1221, %v1217
        %v1223 = vmul.f32 %v1205, %v1222
        %1224 = vrot.lane.b32.xlu0 %v686, 48
        %v1225 = vpop.permute.xlu0 %1224
        %v1228 = vsel %vm691, %v1223, 0
        %1230 = vmatpush.msra.mxu0 0.0
        %1231 = vmatpush.msra.mxu0 0.0
        %1232 = vmatpush.msra.mxu0 0.0
        %1233 = vmatpush.msra.mxu0 0.0
        %1234 = vmatpush.msra.mxu0 0.0
        %1235 = vmatpush.msra.mxu0 0.0
        %1236 = vmatpush.msra.mxu0 0.0
        %1237 = vmatpush.msra.mxu0 0.0
        %1238 = vmatpush.msra.mxu0 0.0
        %1239 = vmatpush.msra.mxu0 0.0
        %1240 = vmatpush.msra.mxu0 0.0
        %1241 = vmatpush.msra.mxu0 0.0
        %1242 = vmatpush.msra.mxu0 0.0
        %1243 = vmatpush.msra.mxu0 0.0
        %1244 = vmatpush.msra.mxu0 0.0
        %1245 = vmatpush.msra.mxu0 %v1225
        %1246 = vmatmul.f32.gmra.mxu0 %v1228
        %v1247 = vpop.f32.mrf.mxu0
        %v1248 = vadd.f32 0.0, %v1247
        %1249 = vdwg.mxu0
        %1250 = vrot.lane.b32.xlu0 %v686, 104
        %v1251 = vpop.permute.xlu0 %1250
        %1252 = vrot.lane.b32.xlu0 %v686, 72
        %v1253 = vpop.permute.xlu0 %1252
        %v1254 = vsel %vm691, %v1251, 0
        %v1256 = vsel %vm691, %v1253, 0
        %1258 = vmatpush.xpose.msra.mxu0 0.0
        %1259 = vmatpush.xpose.msra.mxu0 0.0
        %1260 = vmatpush.xpose.msra.mxu0 0.0
        %1261 = vmatpush.xpose.msra.mxu0 0.0
        %1262 = vmatpush.xpose.msra.mxu0 0.0
        %1263 = vmatpush.xpose.msra.mxu0 0.0
        %1264 = vmatpush.xpose.msra.mxu0 0.0
        %1265 = vmatpush.xpose.msra.mxu0 0.0
        %1266 = vmatpush.xpose.msra.mxu0 0.0
        %1267 = vmatpush.xpose.msra.mxu0 0.0
        %1268 = vmatpush.xpose.msra.mxu0 0.0
        %1269 = vmatpush.xpose.msra.mxu0 0.0
        %1270 = vmatpush.xpose.msra.mxu0 0.0
        %1271 = vmatpush.xpose.msra.mxu0 0.0
        %1272 = vmatpush.xpose.msra.mxu0 0.0
        %1273 = vmatpush.xpose.msra.mxu0 %v1256
        %1274 = vmatmul.f32.gmra.mxu0 %v1254
        %v1275 = vpop.f32.mrf.mxu0
        %v1276 = vadd.f32 0.0, %v1275
        %1277 = vdwg.mxu0
        %v1278 = vsel %vm691, %v1276, -inf
        %1279 = vmax.xlane.f32.xlu0 %v1278
        %v1280 = vpop.xlane.xlu0 %1279
        %v1281 = vsub.f32 %v1276, %v1280
        %v1282 = vmul.f32 %v1281, 1.442695
        %v1283 = vpow.pop %v1282
        %v1284 = vsel %vm691, %v1283, 0.0
        %1285 = vadd.xlane.f32.xlu0 %v1284
        %v1286 = vpop.xlane.xlu0 %1285
        %v1287 = vrcp.pop %v1286
        %v1288 = vmul.f32 %v1286, %v1287
        %v1289 = vsub.f32 1.0, %v1288
        %v1290 = vmul.f32 %v1287, %v1289
        %v1291 = vadd.f32 %v1287, %v1290
        %vm1292 = vweird.f32 %v1286
        %vm1293 = vweird.f32 %v1287
        %vm1294 = vmor %vm1292, %vm1293
        %v1295 = vsel %vm1294, %v1287, %v1291
        %v1296 = vand.u32 2147483647, %v1286
        %vm1297 = vcmp.eq.f32.partialorder %v1296, 8.507059e+37
        %v1298 = vand.u32 %v1286, 2147483648
        %v1299 = vor.u32 1.1754944e-38, %v1298
        %v1300 = vsel %vm1297, %v1299, %v1295
        %v1301 = vmul.f32 %v1283, %v1300
        %1302 = vrot.lane.b32.xlu0 %v686, 40
        %v1303 = vpop.permute.xlu0 %1302
        %v1306 = vsel %vm691, %v1301, 0
        %1308 = vmatpush.msra.mxu0 0.0
        %1309 = vmatpush.msra.mxu0 0.0
        %1310 = vmatpush.msra.mxu0 0.0
        %1311 = vmatpush.msra.mxu0 0.0
        %1312 = vmatpush.msra.mxu0 0.0
        %1313 = vmatpush.msra.mxu0 0.0
        %1314 = vmatpush.msra.mxu0 0.0
        %1315 = vmatpush.msra.mxu0 0.0
        %1316 = vmatpush.msra.mxu0 0.0
        %1317 = vmatpush.msra.mxu0 0.0
        %1318 = vmatpush.msra.mxu0 0.0
        %1319 = vmatpush.msra.mxu0 0.0
        %1320 = vmatpush.msra.mxu0 0.0
        %1321 = vmatpush.msra.mxu0 0.0
        %1322 = vmatpush.msra.mxu0 0.0
        %1323 = vmatpush.msra.mxu0 %v1303
        %1324 = vmatmul.f32.gmra.mxu0 %v1306
        %v1325 = vpop.f32.mrf.mxu0
        %v1326 = vadd.f32 0.0, %v1325
        %1327 = vdwg.mxu0
        %1329 = vrot.lane.b32.xlu0 %v1170, 8
        %v1330 = vpop.permute.xlu0 %1329
        %1333 = vrot.lane.b32.xlu0 %v1248, 16
        %v1334 = vpop.permute.xlu0 %1333
        %1337 = vrot.lane.b32.xlu0 %v1326, 24
        %v1338 = vpop.permute.xlu0 %1337
        %v1340 = vsel %vm691, %v1092, %v1330
        %v1341 = vsel %vm1013, %v1340, %v1334
        %v1342 = vsel %vm1015, %v1341, %v1338
        %v1343 = vld [vmem:[%s559] sm:$0xff]
        %v1344 = vld [vmem:[%s559 + $0x8] sm:$0xff]
        %v1345 = vld [vmem:[%s559 + $0x10] sm:$0xff]
        %v1346 = vld [vmem:[%s559 + $0x18] sm:$0xff]
        %v1348 = vsel %vm593, %v1016, 0
        %v1351 = vsel %vm593, %v1342, 0
        %1353 = vmatpush.msra.mxu0 0.0
        %1354 = vmatpush.msra.mxu0 0.0
        %1355 = vmatpush.msra.mxu0 0.0
        %1356 = vmatpush.msra.mxu0 0.0
        %1357 = vmatpush.msra.mxu0 0.0
        %1358 = vmatpush.msra.mxu0 0.0
        %1359 = vmatpush.msra.mxu0 0.0
        %1360 = vmatpush.msra.mxu0 0.0
        %1361 = vmatpush.msra.mxu0 0.0
        %1362 = vmatpush.msra.mxu0 0.0
        %1363 = vmatpush.msra.mxu0 0.0
        %1364 = vmatpush.msra.mxu0 0.0
        %1365 = vmatpush.msra.mxu0 %v1346
        %1366 = vmatpush.msra.mxu0 %v1345
        %1367 = vmatpush.msra.mxu0 %v1344
        %1368 = vmatpush.msra.mxu0 %v1343
        %1369 = vmatmul.f32.gmra.mxu0 %v1348
        %v1370 = vpop.f32.mrf.mxu0
        %v1371 = vadd.f32 0.0, %v1370
        %1372 = vmatmul.f32.gmra.mxu0 %v1351
        %v1373 = vpop.f32.mrf.mxu0
        %v1374 = vadd.f32 0.0, %v1373
        %1375 = vdwg.mxu0
        %v1376 = vadd.f32 %v589, %v1371
        %v1377 = vadd.f32 %v590, %v1374
        %v1378 = vld [vmem:[%s562] sm:$0x1]
        %v1380 = vperm.slane %v1378, 0
        %v1382 = vadd.f32 %v1376, %v1380
        %v1383 = vadd.f32 %v1377, %v1380
        %v1384 = vld [vmem:[%s565] sm:$0x1]
        %v1385 = vld [vmem:[%s568] sm:$0x1]
        %v1386 = vsel %vm593, %v1382, 0.0
        %1387 = vadd.xlane.f32.xlu0 %v1386
        %v1388 = vpop.xlane.xlu0 %1387
        %v1389 = vsel %vm593, %v1383, 0.0
        %1390 = vadd.xlane.f32.xlu0 %v1389
        %v1391 = vpop.xlane.xlu0 %1390
        %v1392 = vmul.f32 %v1388, %v606
        %v1393 = vmul.f32 %v1391, %v606
        %v1394 = vsub.f32 %v1382, %v1392
        %v1395 = vsub.f32 %v1383, %v1393
        %v1396 = vmul.f32 %v1394, %v1394
        %v1397 = vmul.f32 %v1395, %v1395
        %v1398 = vsel %vm593, %v1396, 0.0
        %1399 = vadd.xlane.f32.xlu0 %v1398
        %v1400 = vpop.xlane.xlu0 %1399
        %v1401 = vsel %vm593, %v1397, 0.0
        %1402 = vadd.xlane.f32.xlu0 %v1401
        %v1403 = vpop.xlane.xlu0 %1402
        %v1404 = vmul.f32 %v1400, %v606
        %v1405 = vmul.f32 %v1403, %v606
        %v1406 = vadd.f32 %v1404, 1e-05
        %v1407 = vadd.f32 %v1405, 1e-05
        %v1408 = vrsqrt.pop %v1406
        %v1409 = vmul.f32 %v1408, %v1406
        %v1410 = vmul.f32 %v1409, %v1408
        %v1411 = vmul.f32 0.5, %v1410
        %v1412 = vsub.f32 1.5, %v1411
        %v1413 = vmul.f32 %v1408, %v1412
        %vm1414 = vweird.f32 %v1406
        %vm1415 = vweird.f32 %v1408
        %vm1416 = vmor %vm1414, %vm1415
        %v1417 = vsel %vm1416, %v1408, %v1413
        %v1418 = vrsqrt.pop %v1407
        %v1419 = vmul.f32 %v1418, %v1407
        %v1420 = vmul.f32 %v1419, %v1418
        %v1421 = vmul.f32 0.5, %v1420
        %v1422 = vsub.f32 1.5, %v1421
        %v1423 = vmul.f32 %v1418, %v1422
        %vm1424 = vweird.f32 %v1407
        %vm1425 = vweird.f32 %v1418
        %vm1426 = vmor %vm1424, %vm1425
        %v1427 = vsel %vm1426, %v1418, %v1423
        %v1428 = vmul.f32 %v1394, %v1417
        %v1429 = vmul.f32 %v1395, %v1427
        %v1431 = vperm.slane %v1384, 0
        %v1433 = vmul.f32 %v1428, %v1431
        %v1434 = vmul.f32 %v1429, %v1431
        %v1436 = vperm.slane %v1385, 0
        %v1438 = vadd.f32 %v1433, %v1436
        %v1439 = vadd.f32 %v1434, %v1436
        %v1440 = vld [vmem:[%s471] sm:$0xff]
        %v1441 = vld [vmem:[%s471 + $0x8] sm:$0xff]
        %v1442 = vld [vmem:[%s471 + $0x10] sm:$0xff]
        %v1443 = vld [vmem:[%s471 + $0x18] sm:$0xff]
        %v1444 = vld [vmem:[%s571] sm:$0x1]
        %v1446 = vperm.slane %v1444, 0
        %v1449 = vsel %vm593, %v1438, 0
        %v1452 = vsel %vm593, %v1439, 0
        %1454 = vmatpush.msra.mxu0 0.0
        %1455 = vmatpush.msra.mxu0 0.0
        %1456 = vmatpush.msra.mxu0 0.0
        %1457 = vmatpush.msra.mxu0 0.0
        %1458 = vmatpush.msra.mxu0 0.0
        %1459 = vmatpush.msra.mxu0 0.0
        %1460 = vmatpush.msra.mxu0 0.0
        %1461 = vmatpush.msra.mxu0 0.0
        %1462 = vmatpush.msra.mxu0 0.0
        %1463 = vmatpush.msra.mxu0 0.0
        %1464 = vmatpush.msra.mxu0 0.0
        %1465 = vmatpush.msra.mxu0 0.0
        %1466 = vmatpush.msra.mxu0 %v1443
        %1467 = vmatpush.msra.mxu0 %v1442
        %1468 = vmatpush.msra.mxu0 %v1441
        %1469 = vmatpush.msra.mxu0 %v1440
        %1470 = vmatmul.f32.gmra.mxu0 %v1449
        %v1471 = vpop.f32.mrf.mxu0
        %v1472 = vadd.f32 %v1446, %v1471
        %1473 = vmatmul.f32.gmra.mxu0 %v1452
        %v1474 = vpop.f32.mrf.mxu0
        %v1475 = vadd.f32 %v1446, %v1474
        %1476 = vdwg.mxu0
        %v1477 = vxor.u32 %v1472, 2147483648
        %v1478 = vxor.u32 %v1475, 2147483648
        %v1479 = vmul.f32 %v1477, 1.442695
        %v1480 = vpow.pop %v1479
        %v1481 = vmul.f32 %v1478, 1.442695
        %v1482 = vpow.pop %v1481
        %v1483 = vadd.f32 %v1480, 1.0
        %v1484 = vadd.f32 %v1482, 1.0
        %v1485 = vrcp.pop %v1483
        %v1486 = vmul.f32 %v1483, %v1485
        %v1487 = vsub.f32 1.0, %v1486
        %v1488 = vmul.f32 %v1485, %v1487
        %v1489 = vadd.f32 %v1485, %v1488
        %vm1490 = vweird.f32 %v1483
        %vm1491 = vweird.f32 %v1485
        %vm1492 = vmor %vm1490, %vm1491
        %v1493 = vsel %vm1492, %v1485, %v1489
        %v1494 = vand.u32 2147483647, %v1483
        %vm1495 = vcmp.eq.f32.partialorder %v1494, 8.507059e+37
        %v1496 = vand.u32 %v1483, 2147483648
        %v1497 = vor.u32 1.1754944e-38, %v1496
        %v1498 = vsel %vm1495, %v1497, %v1493
        %v1499 = vmul.f32 1.0, %v1498
        %v1500 = vrcp.pop %v1484
        %v1501 = vmul.f32 %v1484, %v1500
        %v1502 = vsub.f32 1.0, %v1501
        %v1503 = vmul.f32 %v1500, %v1502
        %v1504 = vadd.f32 %v1500, %v1503
        %vm1505 = vweird.f32 %v1484
        %vm1506 = vweird.f32 %v1500
        %vm1507 = vmor %vm1505, %vm1506
        %v1508 = vsel %vm1507, %v1500, %v1504
        %v1509 = vand.u32 2147483647, %v1484
        %vm1510 = vcmp.eq.f32.partialorder %v1509, 8.507059e+37
        %v1511 = vand.u32 %v1484, 2147483648
        %v1512 = vor.u32 1.1754944e-38, %v1511
        %v1513 = vsel %vm1510, %v1512, %v1508
        %v1514 = vmul.f32 1.0, %v1513
        %v1515 = vmul.f32 %v1472, %v1499
        %v1516 = vmul.f32 %v1475, %v1514
        %1519 = vrot.lane.b32.xlu0 %v1472, 80
        %v1520 = vpop.permute.xlu0 %1519
        %1521 = vrot.lane.b32.xlu0 %v1475, 80
        %v1522 = vpop.permute.xlu0 %1521
        %v1525 = vmul.f32 %v1515, %v1520
        %v1526 = vmul.f32 %v1516, %v1522
        %v1527 = vld [vmem:[%s576] sm:$0xff]
        %v1528 = vld [vmem:[%s576 + $0x8] sm:$0xff]
        %v1529 = vld [vmem:[%s576 + $0x10] sm:$0xff]
        %v1530 = vld [vmem:[%s576 + $0x18] sm:$0xff]
        %v1531 = vld [vmem:[%s576 + $0x20] sm:$0xff]
        %v1532 = vld [vmem:[%s576 + $0x28] sm:$0xff]
        %v1533 = vld [vmem:[%s579] sm:$0x1]
        %v1535 = vperm.slane %v1533, 0
        %vm1537 = vcmask 392192
        %v1539 = vsel %vm1537, %v1525, 0
        %v1542 = vsel %vm1537, %v1526, 0
        %1544 = vmatpush.msra.mxu0 0.0
        %1545 = vmatpush.msra.mxu0 0.0
        %1546 = vmatpush.msra.mxu0 0.0
        %1547 = vmatpush.msra.mxu0 0.0
        %1548 = vmatpush.msra.mxu0 0.0
        %1549 = vmatpush.msra.mxu0 0.0
        %1550 = vmatpush.msra.mxu0 0.0
        %1551 = vmatpush.msra.mxu0 0.0
        %1552 = vmatpush.msra.mxu0 0.0
        %1553 = vmatpush.msra.mxu0 0.0
        %1554 = vmatpush.msra.mxu0 %v1532
        %1555 = vmatpush.msra.mxu0 %v1531
        %1556 = vmatpush.msra.mxu0 %v1530
        %1557 = vmatpush.msra.mxu0 %v1529
        %1558 = vmatpush.msra.mxu0 %v1528
        %1559 = vmatpush.msra.mxu0 %v1527
        %1560 = vmatmul.f32.gmra.mxu0 %v1539
        %v1561 = vpop.f32.mrf.mxu0
        %v1562 = vadd.f32 %v1535, %v1561
        %1563 = vmatmul.f32.gmra.mxu0 %v1542
        %v1564 = vpop.f32.mrf.mxu0
        %v1565 = vadd.f32 %v1535, %v1564
        %1566 = vdwg.mxu0
        %v1567 = vadd.f32 %v1382, %v1562
        %v1568 = vadd.f32 %v1383, %v1565
        %1569 = vst.msk [vmem:[#allocation5] sm:$0xff] %vm593, %v1567
        %1570 = vst.msk [vmem:[#allocation5 + $0x8] sm:$0xff] %vm593, %v1568
        // Predicated region
        $region77: #{tpu_custom_call.1} parent=67 // pred_check
          %p1571 = pneg %p347
        $region78: #{tpu_custom_call.1} parent=67 // pred_check_branch
          %1573 = sbr.rel (%p1571) target = $region80
        $region79: #{tpu_custom_call.1} parent=67 // pred_region
          %1575 = vsyncadd [#allocation4], 0
          %s1576 = sshll.u32 [#allocation5], 4
          %s1577 = int_to_ptr.vmem [resolvable:$true] %s1576
          %s1578 = sshll.u32 %s12, 4
          %s1579 = int_to_ptr.hbm [resolvable:$true] %s1578
          %1584 = dma.vmem_to_hbm [thread:$0]  %s1577, 256, %s1579, [#allocation4], 128, 128, 8
        $region80: #{tpu_custom_call.1} parent=67 // pred_fallthru
          _
        // Predicated region
        $region81: #{tpu_custom_call.1} parent=67 // pred_check
          %p1585 = pneg %p347
        $region82: #{tpu_custom_call.1} parent=67 // pred_check_branch
          %1587 = sbr.rel (%p1585) target = $region84
        $region83: #{tpu_custom_call.1} parent=67 // pred_region
          %1589 = dma.done [#allocation4], 256
        $region84: #{tpu_custom_call.1} parent=67 // pred_fallthru
          _
      $region68: #{tpu_custom_call.1} parent=5 // pred_fallthru
        _
      %p1590 = scmp.le.s32.totalorder 2, %s22
      // Predicated region
      $region85: #{tpu_custom_call.1} parent=5 // pred_check
        %p1591 = pneg %p1590
      $region86: #{tpu_custom_call.1} parent=5 // pred_check_branch
        %1593 = sbr.rel (%p1591) target = $region88
      $region87: #{tpu_custom_call.1} parent=5 // pred_region
        %s1594 = ssub.s32 %s22, 2
      $region88: #{tpu_custom_call.1} parent=5 // pred_fallthru
        _
    $region6: #{tpu_custom_call.1} parent=1 // loop_footer
      %s26 = sadd.s32 1, %s22
    $region7: #{tpu_custom_call.1} parent=1 // loop_footer_branch
      %21 = sbr.rel target = $region3
    $region8: #{tpu_custom_call.1} parent=1 // loop_exit
      _
    %1595 = vsyncpa [#allocation3], 1
    %s1596 = scalar_lea.sflag [#allocation3], 1
    %1597 = vsyncpa %s1596, 1
    %1598 = vsyncpa [#allocation4], 1
    %s1599 = scalar_lea.sflag [#allocation4], 1
    %1600 = vsyncpa %s1599, 1

</llo_original>
